<compile_context>
chip_gen: v7x
topology: tpu7x:2x2x1
jax: 0.10.0
libtpu: 0.0.40
codegen_flags: <defaults>
</compile_context>

<pallas_src>
import functools

import jax
import jax.numpy as jnp
from jax.experimental import pallas as pl
from jax.experimental.pallas import tpu as pltpu


def _round_up(x, m):
    return (x + m - 1) // m * m


# ----------------------------------------------------------------------------
# Pallas kernel: one NGCF propagation layer, tiled over (row tiles, k tiles).
# ----------------------------------------------------------------------------
def ngcf_layer_kernel(a_ref, ego_k_ref, ego_i_ref, w_ref, b_ref,
                      ego_out_ref, norm_out_ref, side_acc):
    k = pl.program_id(1)

    @pl.when(k == 0)
    def _():
        side_acc[...] = jnp.zeros_like(side_acc)

    # side[i] += A[i, k] @ ego[k]   (MXU, f32 accumulation; A may be bf16-streamed)
    side_acc[...] += jnp.dot(
        a_ref[...], ego_k_ref[...].astype(a_ref.dtype),
        preferred_element_type=jnp.float32)

    @pl.when(k == pl.num_programs(1) - 1)
    def _():
        side = side_acc[...]                       # (TILE, Dp) f32
        ego = ego_i_ref[...].astype(jnp.float32)   # (TILE, Dp) f32
        # Fused projection: [side, ego*side] @ [[W_gc],[W_bi]] + (b_gc + b_bi)
        cat = jnp.concatenate([side, ego * side], axis=-1)     # (TILE, 2*Dp)
        x = jnp.dot(cat, w_ref[...],
                    preferred_element_type=jnp.float32) + b_ref[...]
        # LeakyReLU(negative_slope=0.2)
        x = jnp.where(x >= 0, x, 0.2 * x)
        ego_out_ref[...] = x.astype(ego_out_ref.dtype)
        # F.normalize(x, p=2, dim=1) with eps=1e-12 (rsqrt -> EUP slot).
        sq = jnp.sum(x * x, axis=1, keepdims=True)
        inv = jax.lax.rsqrt(jnp.maximum(sq, 1e-24))
        norm_out_ref[...] = (x * inv).astype(norm_out_ref.dtype)


def ngcf_layer(A, ego, W2, bias, *, tile):
    """One propagation layer on padded inputs. Returns (new_ego, normalized_ego)."""
    Np = A.shape[0]
    Dp = ego.shape[1]
    Do = W2.shape[1]
    grid = (Np // tile, Np // tile)

    return pl.pallas_call(
        ngcf_layer_kernel,
        grid=grid,
        in_specs=[
            pl.BlockSpec((tile, tile), lambda i, k: (i, k)),    # A tile (streamed)
            pl.BlockSpec((tile, Dp), lambda i, k: (k, 0)),      # ego rows for A@ego
            pl.BlockSpec((tile, Dp), lambda i, k: (i, 0)),      # ego rows for ego*side
            pl.BlockSpec((2 * Dp, Do), lambda i, k: (0, 0)),    # stacked [W_gc; W_bi]
            pl.BlockSpec((1, Do), lambda i, k: (0, 0)),         # fused bias b_gc+b_bi
        ],
        out_specs=(
            pl.BlockSpec((tile, Do), lambda i, k: (i, 0)),      # ego_out (unnormalized)
            pl.BlockSpec((tile, Do), lambda i, k: (i, 0)),      # norm_out
        ),
        out_shape=(
            jax.ShapeDtypeStruct((Np, Do), jnp.float32),
            jax.ShapeDtypeStruct((Np, Do), jnp.float32),
        ),
        scratch_shapes=[pltpu.VMEM((tile, Dp), jnp.float32)],   # side accumulator
        compiler_params=pltpu.CompilerParams(
            dimension_semantics=("parallel", "arbitrary"),
            vmem_limit_bytes=48 * 1024 * 1024),
    )(A, ego, ego, W2, bias)


# ----------------------------------------------------------------------------
# NGCF forward (padding / gathers in plain JAX, per-layer hot path in Pallas).
# ----------------------------------------------------------------------------
@functools.partial(jax.jit,
                   static_argnames=("n_users", "tile", "stream_dtype"))
def ngcf_forward(params, A, users, pos_items, neg_items, *, n_users,
                 tile=512, stream_dtype=jnp.float32):
    N = A.shape[0]
    # Tile must be a multiple of 128; shrink for small graphs, pad N to a multiple.
    tile = min(tile, _round_up(N, 128))
    Np = _round_up(N, tile)

    ego0 = jnp.concatenate([params["user_emb"], params["item_emb"]], axis=0)
    D0 = ego0.shape[1]
    D0p = _round_up(D0, 128)

    # Zero-pad adjacency and embeddings (padding is inert: zero rows/cols).
    A_p = jnp.zeros((Np, Np), stream_dtype).at[:N, :N].set(A.astype(stream_dtype))
    ego = jnp.zeros((Np, D0p), jnp.float32).at[:N, :D0].set(ego0)

    all_embeddings = [ego0]
    for (W_gc, b_gc, W_bi, b_bi) in params["layers"]:
        Din, Dout = W_gc.shape
        Dinp = _round_up(Din, 128)
        Doutp = _round_up(Dout, 128)
        # Stacked, zero-padded weights (fuses the two projection matmuls) and
        # the pre-summed bias (b_gc + b_bi) hoisted out of the kernel.
        W2 = jnp.zeros((2 * Dinp, Doutp), jnp.float32)
        W2 = W2.at[:Din, :Dout].set(W_gc)
        W2 = W2.at[Dinp:Dinp + Din, :Dout].set(W_bi)
        bias = jnp.zeros((1, Doutp), jnp.float32).at[:, :Dout].set(b_gc + b_bi)

        ego, norm = ngcf_layer(A_p, ego, W2, bias, tile=tile)
        all_embeddings.append(norm[:N, :Dout])

    all_embeddings = jnp.concatenate(all_embeddings, axis=1)
    u_g = all_embeddings[:n_users, :]
    i_g = all_embeddings[n_users:, :]
    u_g_embeddings = jnp.take(u_g, users, axis=0)
    pos_i_g_embeddings = jnp.take(i_g, pos_items, axis=0)
    neg_i_g_embeddings = jnp.take(i_g, neg_items, axis=0)
    return u_g_embeddings, pos_i_g_embeddings, neg_i_g_embeddings


# ----------------------------------------------------------------------------
# Deterministic parameter / input construction (xavier_uniform, like the module).
# ----------------------------------------------------------------------------
def xavier_uniform(key, shape):
    fan_in, fan_out = shape[0], shape[1]
    bound = (6.0 / (fan_in + fan_out)) ** 0.5
    return jax.random.uniform(key, shape, jnp.float32, -bound, bound)


def build_params(key, n_users, n_items, emb_size, layer_sizes):
    keys = jax.random.split(key, 2 + 4 * len(layer_sizes))
    params = {
        "user_emb": xavier_uniform(keys[0], (n_users, emb_size)),
        "item_emb": xavier_uniform(keys[1], (n_items, emb_size)),
        "layers": [],
    }
    dims = [emb_size] + list(layer_sizes)
    for k in range(len(layer_sizes)):
        kk = keys[2 + 4 * k: 6 + 4 * k]
        W_gc = xavier_uniform(kk[0], (dims[k], dims[k + 1]))
        b_gc = xavier_uniform(kk[1], (1, dims[k + 1]))
        W_bi = xavier_uniform(kk[2], (dims[k], dims[k + 1]))
        b_bi = xavier_uniform(kk[3], (1, dims[k + 1]))
        params["layers"].append((W_gc, b_gc, W_bi, b_bi))
    return params


def build_norm_adj(key, n_users, n_items):
    """Symmetric-normalized bipartite adjacency, dense (N, N)."""
    N = n_users + n_items
    r = jax.random.bernoulli(key, p=0.1, shape=(n_users, n_items)).astype(jnp.float32)
    A = jnp.zeros((N, N), jnp.float32)
    A = A.at[:n_users, n_users:].set(r)
    A = A.at[n_users:, :n_users].set(r.T)
    deg = jnp.sum(A, axis=1)
    d_inv_sqrt = jnp.where(deg > 0, 1.0 / jnp.sqrt(deg), 0.0)
    return A * d_inv_sqrt[:, None] * d_inv_sqrt[None, :]


# ----------------------------------------------------------------------------
# Pure-JAX reference (mirrors the PyTorch forward exactly, eval mode).
# ----------------------------------------------------------------------------
def ngcf_forward_ref(params, A, users, pos_items, neg_items, n_users):
    ego = jnp.concatenate([params["user_emb"], params["item_emb"]], axis=0)
    all_emb = [ego]
    for (W_gc, b_gc, W_bi, b_bi) in params["layers"]:
        side = A @ ego
        sum_emb = side @ W_gc + b_gc
        bi_emb = (ego * side) @ W_bi + b_bi
        x = sum_emb + bi_emb
        ego = jnp.where(x >= 0, x, 0.2 * x)
        norm = ego / jnp.maximum(
            jnp.sqrt(jnp.sum(ego * ego, axis=1, keepdims=True)), 1e-12)
        all_emb.append(norm)
    all_emb = jnp.concatenate(all_emb, axis=1)
    u = all_emb[:n_users][users]
    p = all_emb[n_users:][pos_items]
    n = all_emb[n_users:][neg_items]
    return u, p, n


if __name__ == "__main__":
    n_users, n_items = 192, 192      # N = 384 -> 3x3 grid of 128x128 A tiles
    emb_size = 64
    layer_sizes = [64, 64]
    batch = 8

    root = jax.random.PRNGKey(0)
    k_param, k_adj, k_u, k_p, k_n = jax.random.split(root, 5)

    params = build_params(k_param, n_users, n_items, emb_size, layer_sizes)
    A = build_norm_adj(k_adj, n_users, n_items)

    users = jax.random.randint(k_u, (batch,), 0, n_users)
    pos_items = jax.random.randint(k_p, (batch,), 0, n_items)
    neg_items = jax.random.randint(k_n, (batch,), 0, n_items)

    u_e, p_e, n_e = ngcf_forward(params, A, users, pos_items, neg_items,
                                 n_users=n_users, tile=128)
    jax.block_until_ready((u_e, p_e, n_e))

    u_r, p_r, n_r = ngcf_forward_ref(params, A, users, pos_items, neg_items, n_users)
    assert jnp.allclose(u_e, u_r, atol=1e-5, rtol=1e-5)
    assert jnp.allclose(p_e, p_r, atol=1e-5, rtol=1e-5)
    assert jnp.allclose(n_e, n_r, atol=1e-5, rtol=1e-5)

    print("KERNEL_OK")
</pallas_src>

<mosaic_0001>
module attributes {stable_mosaic.version = 11 : i64} {
  func.func @ngcf_layer_kernel(%arg0: i32, %arg1: i32, %arg2: memref<128x128xf32, #tpu.memory_space<vmem>>, %arg3: memref<128x128xf32, #tpu.memory_space<vmem>>, %arg4: memref<128x128xf32, #tpu.memory_space<vmem>>, %arg5: memref<256x128xf32, #tpu.memory_space<vmem>>, %arg6: memref<1x128xf32, #tpu.memory_space<vmem>>, %arg7: memref<128x128xf32, #tpu.memory_space<vmem>>, %arg8: memref<128x128xf32, #tpu.memory_space<vmem>>, %arg9: memref<128x128xf32, #tpu.memory_space<vmem>>) attributes {dimension_semantics = [#tpu.dimension_semantics<parallel>, #tpu.dimension_semantics<arbitrary>], iteration_bounds = array<i64: 3, 3>, scalar_prefetch = 0 : i64, scratch_operands = 1 : i64, tpu.core_type = #tpu.core_type<tc>, window_params = [{transform_indices = @transform_0, window_bounds = array<i64: 128, 128>}, {transform_indices = @transform_1, window_bounds = array<i64: 128, 128>}, {transform_indices = @transform_2, window_bounds = array<i64: 128, 128>}, {pipeline_mode = #tpu.pipeline_mode<synchronous>, transform_indices = @transform_3, window_bounds = array<i64: 256, 128>}, {pipeline_mode = #tpu.pipeline_mode<synchronous>, transform_indices = @transform_4, window_bounds = array<i64: 1, 128>}, {transform_indices = @transform_5, window_bounds = array<i64: 128, 128>}, {transform_indices = @transform_6, window_bounds = array<i64: 128, 128>}]} {
    %c0_i32 = arith.constant 0 : i32
    %0 = arith.cmpi eq, %arg1, %c0_i32 : i32
    %1 = arith.extui %0 : i1 to i32
    %c0_i32_0 = arith.constant 0 : i32
    %2 = arith.cmpi ne, %1, %c0_i32_0 : i32
    scf.if %2 {
      %cst_9 = arith.constant 0.000000e+00 : f32
      %12 = vector.broadcast %cst_9 : f32 to vector<128x128xf32>
      %c0_10 = arith.constant 0 : index
      %c0_11 = arith.constant 0 : index
      %13 = vector.load %arg9[%c0_10, %c0_11] : memref<128x128xf32, #tpu.memory_space<vmem>>, vector<128x128xf32>
      tpu.vector_store %arg9[%c0_10, %c0_11], %12 {strides = array<i32>} : memref<128x128xf32, #tpu.memory_space<vmem>>, vector<128x128xf32>,
    } else {
    }
    %c0 = arith.constant 0 : index
    %c0_1 = arith.constant 0 : index
    %3 = vector.load %arg9[%c0, %c0_1] : memref<128x128xf32, #tpu.memory_space<vmem>>, vector<128x128xf32>
    %c0_2 = arith.constant 0 : index
    %c0_3 = arith.constant 0 : index
    %4 = vector.load %arg2[%c0_2, %c0_3] : memref<128x128xf32, #tpu.memory_space<vmem>>, vector<128x128xf32>
    %c0_4 = arith.constant 0 : index
    %c0_5 = arith.constant 0 : index
    %5 = vector.load %arg3[%c0_4, %c0_5] : memref<128x128xf32, #tpu.memory_space<vmem>>, vector<128x128xf32>
    %cst = arith.constant dense<0.000000e+00> : vector<128x128xf32>
    %6 = tpu.matmul %4, %5, %cst {dimension_numbers = #tpu.dot_dimension_numbers<[1], [0], [0], [1], [0, 0, 1, 1], [], []>} : vector<128x128xf32>, vector<128x128xf32>, vector<128x128xf32> -> vector<128x128xf32>
    %7 = arith.addf %3, %6 : vector<128x128xf32>
    %c0_6 = arith.constant 0 : index
    %c0_7 = arith.constant 0 : index
    %8 = vector.load %arg9[%c0_6, %c0_7] : memref<128x128xf32, #tpu.memory_space<vmem>>, vector<128x128xf32>
    tpu.vector_store %arg9[%c0_6, %c0_7], %7 {strides = array<i32>} : memref<128x128xf32, #tpu.memory_space<vmem>>, vector<128x128xf32>,
    %c2_i32 = arith.constant 2 : i32
    %9 = arith.cmpi eq, %arg1, %c2_i32 : i32
    %10 = arith.extui %9 : i1 to i32
    %c0_i32_8 = arith.constant 0 : i32
    %11 = arith.cmpi ne, %10, %c0_i32_8 : i32
    scf.if %11 {
      %c0_9 = arith.constant 0 : index
      %c0_10 = arith.constant 0 : index
      %12 = vector.load %arg9[%c0_9, %c0_10] : memref<128x128xf32, #tpu.memory_space<vmem>>, vector<128x128xf32>
      %c0_11 = arith.constant 0 : index
      %c0_12 = arith.constant 0 : index
      %13 = vector.load %arg4[%c0_11, %c0_12] : memref<128x128xf32, #tpu.memory_space<vmem>>, vector<128x128xf32>
      %14 = arith.mulf %13, %12 : vector<128x128xf32>
      %15 = tpu.concatenate %12, %14 in 1 : vector<128x128xf32>, vector<128x128xf32> -> vector<128x256xf32>
      %c0_13 = arith.constant 0 : index
      %c0_14 = arith.constant 0 : index
      %16 = vector.load %arg5[%c0_13, %c0_14] : memref<256x128xf32, #tpu.memory_space<vmem>>, vector<256x128xf32>
      %cst_15 = arith.constant dense<0.000000e+00> : vector<128x128xf32>
      %17 = tpu.matmul %15, %16, %cst_15 {dimension_numbers = #tpu.dot_dimension_numbers<[1], [0], [0], [1], [0, 0, 1, 1], [], []>} : vector<128x256xf32>, vector<256x128xf32>, vector<128x128xf32> -> vector<128x128xf32>
      %c0_16 = arith.constant 0 : index
      %c0_17 = arith.constant 0 : index
      %18 = vector.load %arg6[%c0_16, %c0_17] : memref<1x128xf32, #tpu.memory_space<vmem>>, vector<1x128xf32>
      %19 = vector.broadcast %18 : vector<1x128xf32> to vector<128x128xf32>
      %20 = arith.addf %17, %19 : vector<128x128xf32>
      %cst_18 = arith.constant 0.000000e+00 : f32
      %21 = vector.broadcast %cst_18 : f32 to vector<128x128xf32>
      %22 = arith.cmpf oge, %20, %21 : vector<128x128xf32>
      %cst_19 = arith.constant 2.000000e-01 : f32
      %23 = vector.broadcast %cst_19 : f32 to vector<128x128xf32>
      %24 = arith.mulf %23, %20 : vector<128x128xf32>
      %25 = arith.select %22, %20, %24 : vector<128x128xi1>, vector<128x128xf32>
      %c0_20 = arith.constant 0 : index
      %c0_21 = arith.constant 0 : index
      %26 = vector.load %arg7[%c0_20, %c0_21] : memref<128x128xf32, #tpu.memory_space<vmem>>, vector<128x128xf32>
      tpu.vector_store %arg7[%c0_20, %c0_21], %25 {strides = array<i32>} : memref<128x128xf32, #tpu.memory_space<vmem>>, vector<128x128xf32>,
      %27 = arith.mulf %25, %25 : vector<128x128xf32>
      %cst_22 = arith.constant dense<0.000000e+00> : vector<128xf32>
      %28 = vector.multi_reduction <add>, %27, %cst_22 [1] : vector<128x128xf32> to vector<128xf32>
      %29 = vector.shape_cast %28 : vector<128xf32> to vector<128x1xf32>
      %cst_23 = arith.constant 1.000000e-24 : f32
      %30 = vector.broadcast %cst_23 : f32 to vector<128x1xf32>
      %31 = arith.maximumf %29, %30 : vector<128x1xf32>
      %32 = math.rsqrt %31 : vector<128x1xf32>
      %33 = vector.broadcast %32 : vector<128x1xf32> to vector<128x128xf32>
      %34 = arith.mulf %25, %33 : vector<128x128xf32>
      %c0_24 = arith.constant 0 : index
      %c0_25 = arith.constant 0 : index
      %35 = vector.load %arg8[%c0_24, %c0_25] : memref<128x128xf32, #tpu.memory_space<vmem>>, vector<128x128xf32>
      tpu.vector_store %arg8[%c0_24, %c0_25], %34 {strides = array<i32>} : memref<128x128xf32, #tpu.memory_space<vmem>>, vector<128x128xf32>,
    } else {
    }
    return
  }
  func.func @transform_0(%arg0: i32, %arg1: i32) -> (i32, i32) {
    %c0_i32 = arith.constant 0 : i32
    return %arg0, %arg1 : i32, i32
  }
  func.func @transform_1(%arg0: i32, %arg1: i32) -> (i32, i32) {
    %c0_i32 = arith.constant 0 : i32
    %c0_i32_0 = arith.constant 0 : i32
    return %arg1, %c0_i32 : i32, i32
  }
  func.func @transform_2(%arg0: i32, %arg1: i32) -> (i32, i32) {
    %c0_i32 = arith.constant 0 : i32
    %c0_i32_0 = arith.constant 0 : i32
    return %arg0, %c0_i32 : i32, i32
  }
  func.func @transform_3(%arg0: i32, %arg1: i32) -> (i32, i32) {
    %c0_i32 = arith.constant 0 : i32
    %c0_i32_0 = arith.constant 0 : i32
    %c0_i32_1 = arith.constant 0 : i32
    return %c0_i32, %c0_i32_0 : i32, i32
  }
  func.func @transform_4(%arg0: i32, %arg1: i32) -> (i32, i32) {
    %c0_i32 = arith.constant 0 : i32
    %c0_i32_0 = arith.constant 0 : i32
    %c0_i32_1 = arith.constant 0 : i32
    return %c0_i32, %c0_i32_0 : i32, i32
  }
  func.func @transform_5(%arg0: i32, %arg1: i32) -> (i32, i32) {
    %c0_i32 = arith.constant 0 : i32
    %c0_i32_0 = arith.constant 0 : i32
    return %arg0, %c0_i32 : i32, i32
  }
  func.func @transform_6(%arg0: i32, %arg1: i32) -> (i32, i32) {
    %c0_i32 = arith.constant 0 : i32
    %c0_i32_0 = arith.constant 0 : i32
    return %arg0, %c0_i32 : i32, i32
  }
}

module attributes {stable_mosaic.version = 11 : i64} {
  func.func @ngcf_layer_kernel(%arg0: i32, %arg1: i32, %arg2: memref<128x128xf32, #tpu.memory_space<vmem>>, %arg3: memref<128x128xf32, #tpu.memory_space<vmem>>, %arg4: memref<128x128xf32, #tpu.memory_space<vmem>>, %arg5: memref<256x128xf32, #tpu.memory_space<vmem>>, %arg6: memref<1x128xf32, #tpu.memory_space<vmem>>, %arg7: memref<128x128xf32, #tpu.memory_space<vmem>>, %arg8: memref<128x128xf32, #tpu.memory_space<vmem>>, %arg9: memref<128x128xf32, #tpu.memory_space<vmem>>) attributes {dimension_semantics = [#tpu.dimension_semantics<parallel>, #tpu.dimension_semantics<arbitrary>], iteration_bounds = array<i64: 3, 3>, scalar_prefetch = 0 : i64, scratch_operands = 1 : i64, tpu.core_type = #tpu.core_type<tc>, window_params = [{transform_indices = @transform_0, window_bounds = array<i64: 128, 128>}, {transform_indices = @transform_1, window_bounds = array<i64: 128, 128>}, {transform_indices = @transform_2, window_bounds = array<i64: 128, 128>}, {pipeline_mode = #tpu.pipeline_mode<synchronous>, transform_indices = @transform_3, window_bounds = array<i64: 256, 128>}, {pipeline_mode = #tpu.pipeline_mode<synchronous>, transform_indices = @transform_4, window_bounds = array<i64: 1, 128>}, {transform_indices = @transform_5, window_bounds = array<i64: 128, 128>}, {transform_indices = @transform_6, window_bounds = array<i64: 128, 128>}]} {
    %c0_i32 = arith.constant 0 : i32
    %0 = arith.cmpi eq, %arg1, %c0_i32 : i32
    %1 = arith.extui %0 : i1 to i32
    %c0_i32_0 = arith.constant 0 : i32
    %2 = arith.cmpi ne, %1, %c0_i32_0 : i32
    scf.if %2 {
      %cst_9 = arith.constant 0.000000e+00 : f32
      %12 = vector.broadcast %cst_9 : f32 to vector<128x128xf32>
      %c0_10 = arith.constant 0 : index
      %c0_11 = arith.constant 0 : index
      %13 = vector.load %arg9[%c0_10, %c0_11] : memref<128x128xf32, #tpu.memory_space<vmem>>, vector<128x128xf32>
      tpu.vector_store %arg9[%c0_10, %c0_11], %12 {strides = array<i32>} : memref<128x128xf32, #tpu.memory_space<vmem>>, vector<128x128xf32>,
    } else {
    }
    %c0 = arith.constant 0 : index
    %c0_1 = arith.constant 0 : index
    %3 = vector.load %arg9[%c0, %c0_1] : memref<128x128xf32, #tpu.memory_space<vmem>>, vector<128x128xf32>
    %c0_2 = arith.constant 0 : index
    %c0_3 = arith.constant 0 : index
    %4 = vector.load %arg2[%c0_2, %c0_3] : memref<128x128xf32, #tpu.memory_space<vmem>>, vector<128x128xf32>
    %c0_4 = arith.constant 0 : index
    %c0_5 = arith.constant 0 : index
    %5 = vector.load %arg3[%c0_4, %c0_5] : memref<128x128xf32, #tpu.memory_space<vmem>>, vector<128x128xf32>
    %cst = arith.constant dense<0.000000e+00> : vector<128x128xf32>
    %6 = tpu.matmul %4, %5, %cst {dimension_numbers = #tpu.dot_dimension_numbers<[1], [0], [0], [1], [0, 0, 1, 1], [], []>} : vector<128x128xf32>, vector<128x128xf32>, vector<128x128xf32> -> vector<128x128xf32>
    %7 = arith.addf %3, %6 : vector<128x128xf32>
    %c0_6 = arith.constant 0 : index
    %c0_7 = arith.constant 0 : index
    %8 = vector.load %arg9[%c0_6, %c0_7] : memref<128x128xf32, #tpu.memory_space<vmem>>, vector<128x128xf32>
    tpu.vector_store %arg9[%c0_6, %c0_7], %7 {strides = array<i32>} : memref<128x128xf32, #tpu.memory_space<vmem>>, vector<128x128xf32>,
    %c2_i32 = arith.constant 2 : i32
    %9 = arith.cmpi eq, %arg1, %c2_i32 : i32
    %10 = arith.extui %9 : i1 to i32
    %c0_i32_8 = arith.constant 0 : i32
    %11 = arith.cmpi ne, %10, %c0_i32_8 : i32
    scf.if %11 {
      %c0_9 = arith.constant 0 : index
      %c0_10 = arith.constant 0 : index
      %12 = vector.load %arg9[%c0_9, %c0_10] : memref<128x128xf32, #tpu.memory_space<vmem>>, vector<128x128xf32>
      %c0_11 = arith.constant 0 : index
      %c0_12 = arith.constant 0 : index
      %13 = vector.load %arg4[%c0_11, %c0_12] : memref<128x128xf32, #tpu.memory_space<vmem>>, vector<128x128xf32>
      %14 = arith.mulf %13, %12 : vector<128x128xf32>
      %15 = tpu.concatenate %12, %14 in 1 : vector<128x128xf32>, vector<128x128xf32> -> vector<128x256xf32>
      %c0_13 = arith.constant 0 : index
      %c0_14 = arith.constant 0 : index
      %16 = vector.load %arg5[%c0_13, %c0_14] : memref<256x128xf32, #tpu.memory_space<vmem>>, vector<256x128xf32>
      %cst_15 = arith.constant dense<0.000000e+00> : vector<128x128xf32>
      %17 = tpu.matmul %15, %16, %cst_15 {dimension_numbers = #tpu.dot_dimension_numbers<[1], [0], [0], [1], [0, 0, 1, 1], [], []>} : vector<128x256xf32>, vector<256x128xf32>, vector<128x128xf32> -> vector<128x128xf32>
      %c0_16 = arith.constant 0 : index
      %c0_17 = arith.constant 0 : index
      %18 = vector.load %arg6[%c0_16, %c0_17] : memref<1x128xf32, #tpu.memory_space<vmem>>, vector<1x128xf32>
      %19 = vector.broadcast %18 : vector<1x128xf32> to vector<128x128xf32>
      %20 = arith.addf %17, %19 : vector<128x128xf32>
      %cst_18 = arith.constant 0.000000e+00 : f32
      %21 = vector.broadcast %cst_18 : f32 to vector<128x128xf32>
      %22 = arith.cmpf oge, %20, %21 : vector<128x128xf32>
      %cst_19 = arith.constant 2.000000e-01 : f32
      %23 = vector.broadcast %cst_19 : f32 to vector<128x128xf32>
      %24 = arith.mulf %23, %20 : vector<128x128xf32>
      %25 = arith.select %22, %20, %24 : vector<128x128xi1>, vector<128x128xf32>
      %c0_20 = arith.constant 0 : index
      %c0_21 = arith.constant 0 : index
      %26 = vector.load %arg7[%c0_20, %c0_21] : memref<128x128xf32, #tpu.memory_space<vmem>>, vector<128x128xf32>
      tpu.vector_store %arg7[%c0_20, %c0_21], %25 {strides = array<i32>} : memref<128x128xf32, #tpu.memory_space<vmem>>, vector<128x128xf32>,
      %27 = arith.mulf %25, %25 : vector<128x128xf32>
      %cst_22 = arith.constant dense<0.000000e+00> : vector<128xf32>
      %28 = vector.multi_reduction <add>, %27, %cst_22 [1] : vector<128x128xf32> to vector<128xf32>
      %29 = vector.shape_cast %28 : vector<128xf32> to vector<128x1xf32>
      %cst_23 = arith.constant 1.000000e-24 : f32
      %30 = vector.broadcast %cst_23 : f32 to vector<128x1xf32>
      %31 = arith.maximumf %29, %30 : vector<128x1xf32>
      %32 = math.rsqrt %31 : vector<128x1xf32>
      %33 = vector.broadcast %32 : vector<128x1xf32> to vector<128x128xf32>
      %34 = arith.mulf %25, %33 : vector<128x128xf32>
      %c0_24 = arith.constant 0 : index
      %c0_25 = arith.constant 0 : index
      %35 = vector.load %arg8[%c0_24, %c0_25] : memref<128x128xf32, #tpu.memory_space<vmem>>, vector<128x128xf32>
      tpu.vector_store %arg8[%c0_24, %c0_25], %34 {strides = array<i32>} : memref<128x128xf32, #tpu.memory_space<vmem>>, vector<128x128xf32>,
    } else {
    }
    return
  }
  func.func @transform_0(%arg0: i32, %arg1: i32) -> (i32, i32) {
    %c0_i32 = arith.constant 0 : i32
    return %arg0, %arg1 : i32, i32
  }
  func.func @transform_1(%arg0: i32, %arg1: i32) -> (i32, i32) {
    %c0_i32 = arith.constant 0 : i32
    %c0_i32_0 = arith.constant 0 : i32
    return %arg1, %c0_i32 : i32, i32
  }
  func.func @transform_2(%arg0: i32, %arg1: i32) -> (i32, i32) {
    %c0_i32 = arith.constant 0 : i32
    %c0_i32_0 = arith.constant 0 : i32
    return %arg0, %c0_i32 : i32, i32
  }
  func.func @transform_3(%arg0: i32, %arg1: i32) -> (i32, i32) {
    %c0_i32 = arith.constant 0 : i32
    %c0_i32_0 = arith.constant 0 : i32
    %c0_i32_1 = arith.constant 0 : i32
    return %c0_i32, %c0_i32_0 : i32, i32
  }
  func.func @transform_4(%arg0: i32, %arg1: i32) -> (i32, i32) {
    %c0_i32 = arith.constant 0 : i32
    %c0_i32_0 = arith.constant 0 : i32
    %c0_i32_1 = arith.constant 0 : i32
    return %c0_i32, %c0_i32_0 : i32, i32
  }
  func.func @transform_5(%arg0: i32, %arg1: i32) -> (i32, i32) {
    %c0_i32 = arith.constant 0 : i32
    %c0_i32_0 = arith.constant 0 : i32
    return %arg0, %c0_i32 : i32, i32
  }
  func.func @transform_6(%arg0: i32, %arg1: i32) -> (i32, i32) {
    %c0_i32 = arith.constant 0 : i32
    %c0_i32_0 = arith.constant 0 : i32
    return %arg0, %c0_i32 : i32, i32
  }
}

</mosaic_0001>

<llo_original>
// kernel: ngcf_forward.2
$region0: #{ngcf_forward.2}
  #allocation0 [shape = 'u32[]', space=smem, size = 0x4, offset = 0x4, fixed_abs, tag = 'smem constant byte address 0x4 - core index']
  #allocation1 [shape = 'u32[144,128]{1,0:T(1,128)}', space=vmem, size = 0x12000, scoped, tag = 'internal scratch']
  #allocation2 [shape = 'f32[128,128]{1,0:T(8,128)}', space=vmem, size = 0x10000, scoped, tag = 'scratch operand']
  %s0 = inlined_call_operand.vmem [shape: f32[384,384], index: 0, kind: input, shape index: {}]
  %s1 = inlined_call_operand.vmem [shape: f32[384,128], index: 1, kind: input, shape index: {}, may-alias: {1,2}]
  %s2 = inlined_call_operand.vmem [shape: f32[384,128], index: 2, kind: input, shape index: {}, may-alias: {1,2}]
  %s3 = inlined_call_operand.vmem [shape: f32[256,128], index: 3, kind: input, shape index: {}]
  %s4 = inlined_call_operand.vmem [shape: f32[1,128], index: 4, kind: input, shape index: {}]
  %s5 = inlined_call_operand.vmem [shape: f32[384,128], index: 5, kind: output, shape index: {0}]
  %s6 = inlined_call_operand.vmem [shape: f32[384,128], index: 6, kind: output, shape index: {1}]
  %7 = xla_tuple %s5, %s6
  %s8 = sld [smem:[#allocation0]]
  $region107: #{ngcf_forward.2} parent=0
    _
  %s10 = ssub.s32 1, %s8
  %s11 = scalar_select 0, %s10, %s8
  $region1: #{ngcf_forward.2} parent=0
    #allocation3 [shape = 'u8[131072]{0}', space=vmem, size = 0x20000, scoped, tag = 'input window, operand 0']
    loop: start=0, step=1, limit=11
    $region2: #{ngcf_forward.2} parent=1 // loop_pre_header
      _
    $region3: #{ngcf_forward.2} parent=1 // loop_header
      %s13 = sphi 0, %s17
      %p14 = scmp.ge.s32.totalorder %s13, 11
      %s20 = sphi 0, %s32
      %s21 = sphi 0, %s28
      %s22 = sphi 0, %s20
      %s23 = sphi 0, %s21
      %s24 = sphi 0, %s22
      %s25 = sphi 0, %s23
      %s37 = sphi 0, %s39
      %s40 = sphi 0, %s37
      %s41 = sphi 0, %s40
      %s57 = sphi 0, %s41
      %s63 = sphi 0, %s65
      %s66 = sphi 0, %s63
      %s67 = sphi 0, %s66
      %s83 = sphi 0, %s67
      %s89 = sphi 0, %s91
      %s92 = sphi 0, %s89
      %s93 = sphi 0, %s92
      %s109 = sphi 0, %s93
      %s113 = sphi 0, %s113
      %s115 = sphi 0, %s113
      %s116 = sphi 0, %s115
      %s130 = sphi 0, %s116
      %s134 = sphi 0, %s134
      %s136 = sphi 0, %s134
      %s137 = sphi 0, %s136
      %s151 = sphi 0, %s137
      %s157 = sphi 0, %s159
      %s160 = sphi 0, %s157
      %s161 = sphi 0, %s160
      %s177 = sphi 0, %s161
      %s183 = sphi 0, %s185
      %s186 = sphi 0, %s183
      %s187 = sphi 0, %s186
      %s203 = sphi 0, %s187
    $region4: #{ngcf_forward.2} parent=1 // loop_header_branch
      %16 = sbr.rel (%p14) target = $region8
    $region5: #{ngcf_forward.2} parent=1 // loop_body
      %s18 = ssub.s32 %s13, 1
      %s19 = ssub.s32 %s13, 2
      %s26 = sadd.s32 1, %s21
      %p27 = scmp.ge.s32.totalorder %s26, 3
      %s28 = scalar_select %p27, 0, %s26
      %s29 = sadd.s32 1, %s20
      %s30 = scalar_select %p27, %s29, %s20
      %p31 = scmp.ge.s32.totalorder %s30, 3
      %s32 = scalar_select %p31, 0, %s30
      %s33 = ssub.s32 %s20, %s32
      %s34 = ssub.s32 %s21, %s28
      %s35 = sor.u32 %s33, %s34
      %p36 = scmp.eq.s32.totalorder %s35, 0
      %s38 = sadd.s32 %s37, 1
      %s39 = scalar_select %p36, %s37, %s38
      %p42 = pneg %p36
      %p43 = scmp.eq.s32.totalorder %s13, 8
      %p44 = por %p42, %p43
      %p45 = scmp.ne.s32.totalorder %s37, %s40
      %p46 = scmp.eq.s32.totalorder %s13, 0
      %p47 = por %p45, %p46
      %p48 = scmp.ne.s32.totalorder %s37, %s40
      %p49 = scmp.eq.s32.totalorder %s18, 8
      %p50 = por %p48, %p49
      %p51 = scmp.ne.s32.totalorder %s40, %s41
      %p52 = scmp.eq.s32.totalorder %s18, 0
      %p53 = por %p51, %p52
      %p54 = scmp.ne.s32.totalorder %s40, %s41
      %p55 = scmp.eq.s32.totalorder %s19, 8
      %p56 = por %p54, %p55
      %p58 = scmp.ne.s32.totalorder %s41, %s57
      %p59 = scmp.eq.s32.totalorder %s19, 0
      %p60 = por %p58, %p59
      %s61 = ssub.s32 %s21, %s28
      %p62 = scmp.eq.s32.totalorder %s61, 0
      %s64 = sadd.s32 %s63, 1
      %s65 = scalar_select %p62, %s63, %s64
      %p68 = pneg %p62
      %p69 = scmp.eq.s32.totalorder %s13, 8
      %p70 = por %p68, %p69
      %p71 = scmp.ne.s32.totalorder %s63, %s66
      %p72 = scmp.eq.s32.totalorder %s13, 0
      %p73 = por %p71, %p72
      %p74 = scmp.ne.s32.totalorder %s63, %s66
      %p75 = scmp.eq.s32.totalorder %s18, 8
      %p76 = por %p74, %p75
      %p77 = scmp.ne.s32.totalorder %s66, %s67
      %p78 = scmp.eq.s32.totalorder %s18, 0
      %p79 = por %p77, %p78
      %p80 = scmp.ne.s32.totalorder %s66, %s67
      %p81 = scmp.eq.s32.totalorder %s19, 8
      %p82 = por %p80, %p81
      %p84 = scmp.ne.s32.totalorder %s67, %s83
      %p85 = scmp.eq.s32.totalorder %s19, 0
      %p86 = por %p84, %p85
      %s87 = ssub.s32 %s20, %s32
      %p88 = scmp.eq.s32.totalorder %s87, 0
      %s90 = sadd.s32 %s89, 1
      %s91 = scalar_select %p88, %s89, %s90
      %p94 = pneg %p88
      %p95 = scmp.eq.s32.totalorder %s13, 8
      %p96 = por %p94, %p95
      %p97 = scmp.ne.s32.totalorder %s89, %s92
      %p98 = scmp.eq.s32.totalorder %s13, 0
      %p99 = por %p97, %p98
      %p100 = scmp.ne.s32.totalorder %s89, %s92
      %p101 = scmp.eq.s32.totalorder %s18, 8
      %p102 = por %p100, %p101
      %p103 = scmp.ne.s32.totalorder %s92, %s93
      %p104 = scmp.eq.s32.totalorder %s18, 0
      %p105 = por %p103, %p104
      %p106 = scmp.ne.s32.totalorder %s92, %s93
      %p107 = scmp.eq.s32.totalorder %s19, 8
      %p108 = por %p106, %p107
      %p110 = scmp.ne.s32.totalorder %s93, %s109
      %p111 = scmp.eq.s32.totalorder %s19, 0
      %p112 = por %p110, %p111
      %s114 = sadd.s32 %s113, 1
      %p117 = scmp.eq.s32.totalorder %s13, 8
      %p118 = scmp.ne.s32.totalorder %s113, %s115
      %p119 = scmp.eq.s32.totalorder %s13, 0
      %p120 = por %p118, %p119
      %p121 = scmp.ne.s32.totalorder %s113, %s115
      %p122 = scmp.eq.s32.totalorder %s18, 8
      %p123 = por %p121, %p122
      %p124 = scmp.ne.s32.totalorder %s115, %s116
      %p125 = scmp.eq.s32.totalorder %s18, 0
      %p126 = por %p124, %p125
      %p127 = scmp.ne.s32.totalorder %s115, %s116
      %p128 = scmp.eq.s32.totalorder %s19, 8
      %p129 = por %p127, %p128
      %p131 = scmp.ne.s32.totalorder %s116, %s130
      %p132 = scmp.eq.s32.totalorder %s19, 0
      %p133 = por %p131, %p132
      %s135 = sadd.s32 %s134, 1
      %p138 = scmp.eq.s32.totalorder %s13, 8
      %p139 = scmp.ne.s32.totalorder %s134, %s136
      %p140 = scmp.eq.s32.totalorder %s13, 0
      %p141 = por %p139, %p140
      %p142 = scmp.ne.s32.totalorder %s134, %s136
      %p143 = scmp.eq.s32.totalorder %s18, 8
      %p144 = por %p142, %p143
      %p145 = scmp.ne.s32.totalorder %s136, %s137
      %p146 = scmp.eq.s32.totalorder %s18, 0
      %p147 = por %p145, %p146
      %p148 = scmp.ne.s32.totalorder %s136, %s137
      %p149 = scmp.eq.s32.totalorder %s19, 8
      %p150 = por %p148, %p149
      %p152 = scmp.ne.s32.totalorder %s137, %s151
      %p153 = scmp.eq.s32.totalorder %s19, 0
      %p154 = por %p152, %p153
      %s155 = ssub.s32 %s20, %s32
      %p156 = scmp.eq.s32.totalorder %s155, 0
      %s158 = sadd.s32 %s157, 1
      %s159 = scalar_select %p156, %s157, %s158
      %p162 = pneg %p156
      %p163 = scmp.eq.s32.totalorder %s13, 8
      %p164 = por %p162, %p163
      %p165 = scmp.ne.s32.totalorder %s157, %s160
      %p166 = scmp.eq.s32.totalorder %s13, 0
      %p167 = por %p165, %p166
      %p168 = scmp.ne.s32.totalorder %s157, %s160
      %p169 = scmp.eq.s32.totalorder %s18, 8
      %p170 = por %p168, %p169
      %p171 = scmp.ne.s32.totalorder %s160, %s161
      %p172 = scmp.eq.s32.totalorder %s18, 0
      %p173 = por %p171, %p172
      %p174 = scmp.ne.s32.totalorder %s160, %s161
      %p175 = scmp.eq.s32.totalorder %s19, 8
      %p176 = por %p174, %p175
      %p178 = scmp.ne.s32.totalorder %s161, %s177
      %p179 = scmp.eq.s32.totalorder %s19, 0
      %p180 = por %p178, %p179
      %s181 = ssub.s32 %s20, %s32
      %p182 = scmp.eq.s32.totalorder %s181, 0
      %s184 = sadd.s32 %s183, 1
      %s185 = scalar_select %p182, %s183, %s184
      %p188 = pneg %p182
      %p189 = scmp.eq.s32.totalorder %s13, 8
      %p190 = por %p188, %p189
      %p191 = scmp.ne.s32.totalorder %s183, %s186
      %p192 = scmp.eq.s32.totalorder %s13, 0
      %p193 = por %p191, %p192
      %p194 = scmp.ne.s32.totalorder %s183, %s186
      %p195 = scmp.eq.s32.totalorder %s18, 8
      %p196 = por %p194, %p195
      %p197 = scmp.ne.s32.totalorder %s186, %s187
      %p198 = scmp.eq.s32.totalorder %s18, 0
      %p199 = por %p197, %p198
      %p200 = scmp.ne.s32.totalorder %s186, %s187
      %p201 = scmp.eq.s32.totalorder %s19, 8
      %p202 = por %p200, %p201
      %p204 = scmp.ne.s32.totalorder %s187, %s203
      %p205 = scmp.eq.s32.totalorder %s19, 0
      %p206 = por %p204, %p205
      %p207 = scmp.le.s32.totalorder 1, %s13
      %p208 = scmp.lt.s32.totalorder %s13, 10
      %p209 = pnand %p207, %p208
      %p210 = pneg %p209
      // Predicated region
      $region9: #{ngcf_forward.2} parent=5 // pred_check
        _
      $region10: #{ngcf_forward.2} parent=5 // pred_check_branch
        %212 = sbr.rel (%p209) target = $region12
      $region11: #{ngcf_forward.2} parent=5 // pred_region
        %s213 = ssub.s32 %s13, 1
        // Predicated region
        $region13: #{ngcf_forward.2} parent=11 // pred_check
          %p214 = pneg %p126
        $region14: #{ngcf_forward.2} parent=11 // pred_check_branch
          %216 = sbr.rel (%p214) target = $region16
        $region15: #{ngcf_forward.2} parent=11 // pred_region
          _
        $region16: #{ngcf_forward.2} parent=11 // pred_fallthru
          _
        // Predicated region
        $region17: #{ngcf_forward.2} parent=11 // pred_check
          %p217 = pneg %p147
        $region18: #{ngcf_forward.2} parent=11 // pred_check_branch
          %219 = sbr.rel (%p217) target = $region20
        $region19: #{ngcf_forward.2} parent=11 // pred_region
          _
        $region20: #{ngcf_forward.2} parent=11 // pred_fallthru
          _
      $region12: #{ngcf_forward.2} parent=5 // pred_fallthru
        _
      %p220 = scmp.lt.s32.totalorder %s13, 9
      // Predicated region
      $region21: #{ngcf_forward.2} parent=5 // pred_check
        %p221 = pneg %p220
      $region22: #{ngcf_forward.2} parent=5 // pred_check_branch
        %223 = sbr.rel (%p221) target = $region24
      $region23: #{ngcf_forward.2} parent=5 // pred_region
        // Predicated region
        $region25: #{ngcf_forward.2} parent=23 // pred_check
          %p224 = pneg %p47
        $region26: #{ngcf_forward.2} parent=23 // pred_check_branch
          %226 = sbr.rel (%p224) target = $region28
        $region27: #{ngcf_forward.2} parent=23 // pred_region
          %s227 = sand.u32 %s37, 1
          %s228 = sand.u32 %s37, 1
          %s229 = smul.addr %s228, 128
          %s230 = scalar_lea.vmem [#allocation3], %s229
          %s231 = smul.u32 16, %s20
          %s232 = smul.addr %s231, 3
          %s233 = sadd.s32 %s21, %s232
          %s234 = smul.addr %s233, 8
          %s235 = scalar_lea.vmem %s0, %s234
          // Predicated region
          $region29: #{ngcf_forward.2} parent=27 // pred_check
            _
          $region30: #{ngcf_forward.2} parent=27 // pred_check_branch
            %237 = sbr.rel (0) target = $region32
          $region31: #{ngcf_forward.2} parent=27 // pred_region
            // Predicated region
            $region33: #{ngcf_forward.2} parent=31 // pred_check
              _
            $region34: #{ngcf_forward.2} parent=31 // pred_check_branch
              %239 = sbr.rel (0) target = $region36
            $region35: #{ngcf_forward.2} parent=31 // pred_region
              // Predicated region
              $region48: #{ngcf_forward.2} parent=35 // pred_check
                _
              $region49: #{ngcf_forward.2} parent=35 // pred_check_branch
                %284 = sbr.rel (0) target = $region51
              $region50: #{ngcf_forward.2} parent=35 // pred_region
                loop: start=0, step=1, limit=1
                $region52: #{ngcf_forward.2} parent=50 // loop_pre_header
                  _
                $region53: #{ngcf_forward.2} parent=50 // loop_header
                  %s286 = sphi 0, %s290
                  %p287 = scmp.ge.s32.totalorder %s286, 1
                  %s291 = sphi %s235, %s235
                  %s292 = sphi %s230, %s230
                $region54: #{ngcf_forward.2} parent=50 // loop_header_branch
                  %289 = sbr.rel (%p287) target = $region58
                $region55: #{ngcf_forward.2} parent=50 // loop_body
                  %v293 = vld [vmem:[%s291] sm:$0xff]
                  %294 = vst [vmem:[%s292] sm:$0xff] %v293
                  %v295 = vld [vmem:[%s291 + $0x18] sm:$0xff]
                  %296 = vst [vmem:[%s292 + $0x8] sm:$0xff] %v295
                  %v297 = vld [vmem:[%s291 + $0x30] sm:$0xff]
                  %298 = vst [vmem:[%s292 + $0x10] sm:$0xff] %v297
                  %v299 = vld [vmem:[%s291 + $0x48] sm:$0xff]
                  %300 = vst [vmem:[%s292 + $0x18] sm:$0xff] %v299
                  %v301 = vld [vmem:[%s291 + $0x60] sm:$0xff]
                  %302 = vst [vmem:[%s292 + $0x20] sm:$0xff] %v301
                  %v303 = vld [vmem:[%s291 + $0x78] sm:$0xff]
                  %304 = vst [vmem:[%s292 + $0x28] sm:$0xff] %v303
                  %v305 = vld [vmem:[%s291 + $0x90] sm:$0xff]
                  %306 = vst [vmem:[%s292 + $0x30] sm:$0xff] %v305
                  %v307 = vld [vmem:[%s291 + $0xa8] sm:$0xff]
                  %308 = vst [vmem:[%s292 + $0x38] sm:$0xff] %v307
                  %v309 = vld [vmem:[%s291 + $0xc0] sm:$0xff]
                  %310 = vst [vmem:[%s292 + $0x40] sm:$0xff] %v309
                  %v311 = vld [vmem:[%s291 + $0xd8] sm:$0xff]
                  %312 = vst [vmem:[%s292 + $0x48] sm:$0xff] %v311
                  %v313 = vld [vmem:[%s291 + $0xf0] sm:$0xff]
                  %314 = vst [vmem:[%s292 + $0x50] sm:$0xff] %v313
                  %v315 = vld [vmem:[%s291 + $0x108] sm:$0xff]
                  %316 = vst [vmem:[%s292 + $0x58] sm:$0xff] %v315
                  %v317 = vld [vmem:[%s291 + $0x120] sm:$0xff]
                  %318 = vst [vmem:[%s292 + $0x60] sm:$0xff] %v317
                  %v319 = vld [vmem:[%s291 + $0x138] sm:$0xff]
                  %320 = vst [vmem:[%s292 + $0x68] sm:$0xff] %v319
                  %v321 = vld [vmem:[%s291 + $0x150] sm:$0xff]
                  %322 = vst [vmem:[%s292 + $0x70] sm:$0xff] %v321
                  %v323 = vld [vmem:[%s291 + $0x168] sm:$0xff]
                  %324 = vst [vmem:[%s292 + $0x78] sm:$0xff] %v323
                $region56: #{ngcf_forward.2} parent=50 // loop_footer
                  %s290 = sadd.s32 1, %s286
                $region57: #{ngcf_forward.2} parent=50 // loop_footer_branch
                  %285 = sbr.rel target = $region53
                $region58: #{ngcf_forward.2} parent=50 // loop_exit
                  _
              $region51: #{ngcf_forward.2} parent=35 // pred_fallthru
                _
              // Predicated region
              $region59: #{ngcf_forward.2} parent=35 // pred_check
                _
              $region60: #{ngcf_forward.2} parent=35 // pred_check_branch
                %326 = sbr.rel target = $region62
              $region61: #{ngcf_forward.2} parent=35 // pred_region
                _
              $region62: #{ngcf_forward.2} parent=35 // pred_fallthru
                _
            $region36: #{ngcf_forward.2} parent=31 // pred_fallthru
              _
            // Predicated region
            $region37: #{ngcf_forward.2} parent=31 // pred_check
              _
            $region38: #{ngcf_forward.2} parent=31 // pred_check_branch
              %241 = sbr.rel target = $region40
            $region39: #{ngcf_forward.2} parent=31 // pred_region
              loop: start=0, step=1, limit=1
              $region41: #{ngcf_forward.2} parent=39 // loop_pre_header
                _
              $region42: #{ngcf_forward.2} parent=39 // loop_header
                %s244 = sphi 0, %s248
                %p245 = scmp.ge.s32.totalorder %s244, 1
                %s249 = sphi %s235, %s235
                %s250 = sphi %s230, %s230
              $region43: #{ngcf_forward.2} parent=39 // loop_header_branch
                %247 = sbr.rel (%p245) target = $region47
              $region44: #{ngcf_forward.2} parent=39 // loop_body
                %v251 = vld [vmem:[%s249] sm:$0xff]
                %252 = vst [vmem:[%s250] sm:$0xff] %v251
                %v253 = vld [vmem:[%s249 + $0x18] sm:$0xff]
                %254 = vst [vmem:[%s250 + $0x8] sm:$0xff] %v253
                %v255 = vld [vmem:[%s249 + $0x30] sm:$0xff]
                %256 = vst [vmem:[%s250 + $0x10] sm:$0xff] %v255
                %v257 = vld [vmem:[%s249 + $0x48] sm:$0xff]
                %258 = vst [vmem:[%s250 + $0x18] sm:$0xff] %v257
                %v259 = vld [vmem:[%s249 + $0x60] sm:$0xff]
                %260 = vst [vmem:[%s250 + $0x20] sm:$0xff] %v259
                %v261 = vld [vmem:[%s249 + $0x78] sm:$0xff]
                %262 = vst [vmem:[%s250 + $0x28] sm:$0xff] %v261
                %v263 = vld [vmem:[%s249 + $0x90] sm:$0xff]
                %264 = vst [vmem:[%s250 + $0x30] sm:$0xff] %v263
                %v265 = vld [vmem:[%s249 + $0xa8] sm:$0xff]
                %266 = vst [vmem:[%s250 + $0x38] sm:$0xff] %v265
                %v267 = vld [vmem:[%s249 + $0xc0] sm:$0xff]
                %268 = vst [vmem:[%s250 + $0x40] sm:$0xff] %v267
                %v269 = vld [vmem:[%s249 + $0xd8] sm:$0xff]
                %270 = vst [vmem:[%s250 + $0x48] sm:$0xff] %v269
                %v271 = vld [vmem:[%s249 + $0xf0] sm:$0xff]
                %272 = vst [vmem:[%s250 + $0x50] sm:$0xff] %v271
                %v273 = vld [vmem:[%s249 + $0x108] sm:$0xff]
                %274 = vst [vmem:[%s250 + $0x58] sm:$0xff] %v273
                %v275 = vld [vmem:[%s249 + $0x120] sm:$0xff]
                %276 = vst [vmem:[%s250 + $0x60] sm:$0xff] %v275
                %v277 = vld [vmem:[%s249 + $0x138] sm:$0xff]
                %278 = vst [vmem:[%s250 + $0x68] sm:$0xff] %v277
                %v279 = vld [vmem:[%s249 + $0x150] sm:$0xff]
                %280 = vst [vmem:[%s250 + $0x70] sm:$0xff] %v279
                %v281 = vld [vmem:[%s249 + $0x168] sm:$0xff]
                %282 = vst [vmem:[%s250 + $0x78] sm:$0xff] %v281
              $region45: #{ngcf_forward.2} parent=39 // loop_footer
                %s248 = sadd.s32 1, %s244
              $region46: #{ngcf_forward.2} parent=39 // loop_footer_branch
                %243 = sbr.rel target = $region42
              $region47: #{ngcf_forward.2} parent=39 // loop_exit
                _
            $region40: #{ngcf_forward.2} parent=31 // pred_fallthru
              _
          $region32: #{ngcf_forward.2} parent=27 // pred_fallthru
            _
          %327 = vnop
        $region28: #{ngcf_forward.2} parent=23 // pred_fallthru
          _
        // Predicated region
        $region63: #{ngcf_forward.2} parent=23 // pred_check
          %p328 = pneg %p73
        $region64: #{ngcf_forward.2} parent=23 // pred_check_branch
          %330 = sbr.rel (%p328) target = $region66
        $region65: #{ngcf_forward.2} parent=23 // pred_region
          %s331 = smul.u32 16, %s21
          %p332 = scmp.lt.s32.totalorder %s331, 47
          %s333 = scalar_select %p332, %s331, 47
          %s334 = smul.addr %s333, 8
          %s335 = scalar_lea.vmem %s1, %s334
          %s336 = smul.u32 16, %s21
        $region66: #{ngcf_forward.2} parent=23 // pred_fallthru
          _
        // Predicated region
        $region67: #{ngcf_forward.2} parent=23 // pred_check
          %p337 = pneg %p99
        $region68: #{ngcf_forward.2} parent=23 // pred_check_branch
          %339 = sbr.rel (%p337) target = $region70
        $region69: #{ngcf_forward.2} parent=23 // pred_region
          %s340 = smul.u32 16, %s20
          %p341 = scmp.lt.s32.totalorder %s340, 47
          %s342 = scalar_select %p341, %s340, 47
          %s343 = smul.addr %s342, 8
          %s344 = scalar_lea.vmem %s2, %s343
          %s345 = smul.u32 16, %s20
        $region70: #{ngcf_forward.2} parent=23 // pred_fallthru
          _
      $region24: #{ngcf_forward.2} parent=5 // pred_fallthru
        _
      %p346 = scmp.le.s32.totalorder 1, %s13
      %p347 = scmp.lt.s32.totalorder %s13, 10
      %p348 = pnand %p346, %p347
      %p349 = pneg %p348
      // Predicated region
      $region71: #{ngcf_forward.2} parent=5 // pred_check
        _
      $region72: #{ngcf_forward.2} parent=5 // pred_check_branch
        %351 = sbr.rel (%p348) target = $region74
      $region73: #{ngcf_forward.2} parent=5 // pred_region
        %s352 = ssub.s32 %s13, 1
        %s353 = sand.u32 %s40, 1
        %s354 = sand.u32 %s40, 1
        %s355 = smul.addr %s354, 128
        %s356 = scalar_lea.vmem [#allocation3], %s355
        // Predicated region
        $region75: #{ngcf_forward.2} parent=73 // pred_check
          %p357 = pneg %p53
        $region76: #{ngcf_forward.2} parent=73 // pred_check_branch
          %359 = sbr.rel (%p357) target = $region78
        $region77: #{ngcf_forward.2} parent=73 // pred_region
          _
        $region78: #{ngcf_forward.2} parent=73 // pred_fallthru
          _
        %s360 = sand.u32 %s40, 1
        %s361 = sand.u32 %s40, 1
        %s362 = smul.addr %s361, 128
        %s363 = scalar_lea.vmem [#allocation3], %s362
        %p364 = pneg %p53
        %p365 = pneg %p50
        %s366 = smul.u32 16, %s23
        %p367 = scmp.lt.s32.totalorder %s366, 47
        %s368 = scalar_select %p367, %s366, 47
        %s369 = smul.addr %s368, 8
        %s370 = scalar_lea.vmem %s1, %s369
        %p371 = pneg %p79
        %p372 = pneg %p76
        %s373 = smul.u32 16, %s22
        %p374 = scmp.lt.s32.totalorder %s373, 47
        %s375 = scalar_select %p374, %s373, 47
        %s376 = smul.addr %s375, 8
        %s377 = scalar_lea.vmem %s2, %s376
        %p378 = pneg %p105
        %p379 = pneg %p102
        %p380 = pneg %p126
        %p381 = pneg %p123
        %p382 = pneg %p147
        %p383 = pneg %p144
        %p384 = pneg %p173
        %p385 = pneg %p170
        %s386 = smul.u32 16, %s22
        %p387 = scmp.lt.s32.totalorder %s386, 47
        %s388 = scalar_select %p387, %s386, 47
        %s389 = smul.addr %s388, 8
        %s390 = scalar_lea.vmem %s5, %s389
        %p391 = pneg %p199
        %p392 = pneg %p196
        %s393 = smul.u32 16, %s22
        %p394 = scmp.lt.s32.totalorder %s393, 47
        %s395 = scalar_select %p394, %s393, 47
        %s396 = smul.addr %s395, 8
        %s397 = scalar_lea.vmem %s6, %s396
        %s398 = smul.u32 16, %s22
        %s399 = smul.u32 16, %s23
        %p400 = scmp.lt.s32.totalorder %s399, 47
        %s401 = scalar_select %p400, %s399, 47
        %s402 = smul.addr %s401, 8
        %s403 = scalar_lea.vmem %s1, %s402
        %s404 = smul.u32 16, %s23
        %s405 = smul.u32 16, %s22
        %p406 = scmp.lt.s32.totalorder %s405, 47
        %s407 = scalar_select %p406, %s405, 47
        %s408 = smul.addr %s407, 8
        %s409 = scalar_lea.vmem %s2, %s408
        %s410 = smul.u32 16, %s22
        %s411 = smul.u32 16, %s22
        %p412 = scmp.lt.s32.totalorder %s411, 47
        %s413 = scalar_select %p412, %s411, 47
        %s414 = smul.addr %s413, 8
        %s415 = scalar_lea.vmem %s5, %s414
        %s416 = smul.u32 16, %s22
        %s417 = smul.u32 16, %s22
        %p418 = scmp.lt.s32.totalorder %s417, 47
        %s419 = scalar_select %p418, %s417, 47
        %s420 = smul.addr %s419, 8
        %s421 = scalar_lea.vmem %s6, %s420
        %s422 = smul.u32 16, %s22
        %p423 = scmp.eq.s32.totalorder %s23, 0
        // Predicated region
        $region79: #{ngcf_forward.2} parent=73 // pred_check
          %p424 = pneg %p423
        $region80: #{ngcf_forward.2} parent=73 // pred_check_branch
          %426 = sbr.rel (%p424) target = $region82
        $region81: #{ngcf_forward.2} parent=73 // pred_region
          %427 = vst [vmem:[#allocation2] sm:$0xff] 0.0
          %428 = vst [vmem:[#allocation2 + $0x8] sm:$0xff] 0.0
          %429 = vst [vmem:[#allocation2 + $0x10] sm:$0xff] 0.0
          %430 = vst [vmem:[#allocation2 + $0x18] sm:$0xff] 0.0
          %431 = vst [vmem:[#allocation2 + $0x20] sm:$0xff] 0.0
          %432 = vst [vmem:[#allocation2 + $0x28] sm:$0xff] 0.0
          %433 = vst [vmem:[#allocation2 + $0x30] sm:$0xff] 0.0
          %434 = vst [vmem:[#allocation2 + $0x38] sm:$0xff] 0.0
          %435 = vst [vmem:[#allocation2 + $0x40] sm:$0xff] 0.0
          %436 = vst [vmem:[#allocation2 + $0x48] sm:$0xff] 0.0
          %437 = vst [vmem:[#allocation2 + $0x50] sm:$0xff] 0.0
          %438 = vst [vmem:[#allocation2 + $0x58] sm:$0xff] 0.0
          %439 = vst [vmem:[#allocation2 + $0x60] sm:$0xff] 0.0
          %440 = vst [vmem:[#allocation2 + $0x68] sm:$0xff] 0.0
          %441 = vst [vmem:[#allocation2 + $0x70] sm:$0xff] 0.0
          %442 = vst [vmem:[#allocation2 + $0x78] sm:$0xff] 0.0
        $region82: #{ngcf_forward.2} parent=73 // pred_fallthru
          _
        %v443 = vld [vmem:[#allocation2] sm:$0xff]
        %v444 = vld [vmem:[#allocation2 + $0x8] sm:$0xff]
        %v445 = vld [vmem:[#allocation2 + $0x10] sm:$0xff]
        %v446 = vld [vmem:[#allocation2 + $0x18] sm:$0xff]
        %v447 = vld [vmem:[#allocation2 + $0x20] sm:$0xff]
        %v448 = vld [vmem:[#allocation2 + $0x28] sm:$0xff]
        %v449 = vld [vmem:[#allocation2 + $0x30] sm:$0xff]
        %v450 = vld [vmem:[#allocation2 + $0x38] sm:$0xff]
        %v451 = vld [vmem:[#allocation2 + $0x40] sm:$0xff]
        %v452 = vld [vmem:[#allocation2 + $0x48] sm:$0xff]
        %v453 = vld [vmem:[#allocation2 + $0x50] sm:$0xff]
        %v454 = vld [vmem:[#allocation2 + $0x58] sm:$0xff]
        %v455 = vld [vmem:[#allocation2 + $0x60] sm:$0xff]
        %v456 = vld [vmem:[#allocation2 + $0x68] sm:$0xff]
        %v457 = vld [vmem:[#allocation2 + $0x70] sm:$0xff]
        %v458 = vld [vmem:[#allocation2 + $0x78] sm:$0xff]
        %v459 = vld [vmem:[%s356] sm:$0xff]
        %v460 = vld [vmem:[%s356 + $0x8] sm:$0xff]
        %v461 = vld [vmem:[%s356 + $0x10] sm:$0xff]
        %v462 = vld [vmem:[%s356 + $0x18] sm:$0xff]
        %v463 = vld [vmem:[%s356 + $0x20] sm:$0xff]
        %v464 = vld [vmem:[%s356 + $0x28] sm:$0xff]
        %v465 = vld [vmem:[%s356 + $0x30] sm:$0xff]
        %v466 = vld [vmem:[%s356 + $0x38] sm:$0xff]
        %v467 = vld [vmem:[%s356 + $0x40] sm:$0xff]
        %v468 = vld [vmem:[%s356 + $0x48] sm:$0xff]
        %v469 = vld [vmem:[%s356 + $0x50] sm:$0xff]
        %v470 = vld [vmem:[%s356 + $0x58] sm:$0xff]
        %v471 = vld [vmem:[%s356 + $0x60] sm:$0xff]
        %v472 = vld [vmem:[%s356 + $0x68] sm:$0xff]
        %v473 = vld [vmem:[%s356 + $0x70] sm:$0xff]
        %v474 = vld [vmem:[%s356 + $0x78] sm:$0xff]
        %v475 = vld [vmem:[%s403] sm:$0xff]
        %v476 = vld [vmem:[%s403 + $0x8] sm:$0xff]
        %v477 = vld [vmem:[%s403 + $0x10] sm:$0xff]
        %v478 = vld [vmem:[%s403 + $0x18] sm:$0xff]
        %v479 = vld [vmem:[%s403 + $0x20] sm:$0xff]
        %v480 = vld [vmem:[%s403 + $0x28] sm:$0xff]
        %v481 = vld [vmem:[%s403 + $0x30] sm:$0xff]
        %v482 = vld [vmem:[%s403 + $0x38] sm:$0xff]
        %v483 = vld [vmem:[%s403 + $0x40] sm:$0xff]
        %v484 = vld [vmem:[%s403 + $0x48] sm:$0xff]
        %v485 = vld [vmem:[%s403 + $0x50] sm:$0xff]
        %v486 = vld [vmem:[%s403 + $0x58] sm:$0xff]
        %v487 = vld [vmem:[%s403 + $0x60] sm:$0xff]
        %v488 = vld [vmem:[%s403 + $0x68] sm:$0xff]
        %v489 = vld [vmem:[%s403 + $0x70] sm:$0xff]
        %v490 = vld [vmem:[%s403 + $0x78] sm:$0xff]
        %491 = vmatprep.subr.mxu0 0.0
        %492 = vmatpush1.msra.mxu0 %v475
        %493 = vmatprep.subr.mxu0 0.0
        %494 = vmatpush1.msra.mxu0 %v476
        %495 = vmatprep.subr.mxu0 0.0
        %496 = vmatpush1.msra.mxu0 %v477
        %497 = vmatprep.subr.mxu0 0.0
        %498 = vmatpush1.msra.mxu0 %v478
        %499 = vmatprep.subr.mxu0 0.0
        %500 = vmatpush1.msra.mxu0 %v479
        %501 = vmatprep.subr.mxu0 0.0
        %502 = vmatpush1.msra.mxu0 %v480
        %503 = vmatprep.subr.mxu0 0.0
        %504 = vmatpush1.msra.mxu0 %v481
        %505 = vmatprep.subr.mxu0 0.0
        %506 = vmatpush1.msra.mxu0 %v482
        %507 = vmatprep.subr.mxu0 0.0
        %508 = vmatpush1.msra.mxu0 %v483
        %509 = vmatprep.subr.mxu0 0.0
        %510 = vmatpush1.msra.mxu0 %v484
        %511 = vmatprep.subr.mxu0 0.0
        %512 = vmatpush1.msra.mxu0 %v485
        %513 = vmatprep.subr.mxu0 0.0
        %514 = vmatpush1.msra.mxu0 %v486
        %515 = vmatprep.subr.mxu0 0.0
        %516 = vmatpush1.msra.mxu0 %v487
        %517 = vmatprep.subr.mxu0 0.0
        %518 = vmatpush1.msra.mxu0 %v488
        %519 = vmatprep.subr.mxu0 0.0
        %520 = vmatpush1.msra.mxu0 %v489
        %521 = vmatprep.subr.mxu0 0.0
        %522 = vmatpush1.msra.mxu0 %v490
        %523 = vmatprep.subr.mxu0 0.0
        %524 = vmatpush1.msra.mxu0 0.0
        %525 = vmatprep.subr.mxu0 0.0
        %526 = vmatpush1.msra.mxu0 0.0
        %527 = vmatprep.subr.mxu0 0.0
        %528 = vmatpush1.msra.mxu0 0.0
        %529 = vmatprep.subr.mxu0 0.0
        %530 = vmatpush1.msra.mxu0 0.0
        %531 = vmatprep.subr.mxu0 0.0
        %532 = vmatpush1.msra.mxu0 0.0
        %533 = vmatprep.subr.mxu0 0.0
        %534 = vmatpush1.msra.mxu0 0.0
        %535 = vmatprep.subr.mxu0 0.0
        %536 = vmatpush1.msra.mxu0 0.0
        %537 = vmatprep.subr.mxu0 0.0
        %538 = vmatpush1.msra.mxu0 0.0
        %539 = vmatprep.subr.mxu0 0.0
        %540 = vmatpush1.msra.mxu0 0.0
        %541 = vmatprep.subr.mxu0 0.0
        %542 = vmatpush1.msra.mxu0 0.0
        %543 = vmatprep.subr.mxu0 0.0
        %544 = vmatpush1.msra.mxu0 0.0
        %545 = vmatprep.subr.mxu0 0.0
        %546 = vmatpush1.msra.mxu0 0.0
        %547 = vmatprep.subr.mxu0 0.0
        %548 = vmatpush1.msra.mxu0 0.0
        %549 = vmatprep.subr.mxu0 0.0
        %550 = vmatpush1.msra.mxu0 0.0
        %551 = vmatprep.subr.mxu0 0.0
        %552 = vmatpush1.msra.mxu0 0.0
        %553 = vmatprep.subr.mxu0 0.0
        %554 = vmatpush1.msra.mxu0 0.0
        %555 = vmatprep.mubr.f32.mxu0 0.0
        %556 = vmatmul.mubr.f32.gmra.mrb[0].mxu0 %v459
        %v557 = vpop.f32.mrb[0].mxu0
        %v558 = vadd.f32 0.0, %v557
        %v559 = vpop.f32.mrb[0].mxu0
        %560 = vmatprep.mubr.f32.mxu0 0.0
        %561 = vmatmul.mubr.f32.gmra.mrb[0].mxu0 %v460
        %v562 = vpop.f32.mrb[0].mxu0
        %v563 = vadd.f32 0.0, %v562
        %v564 = vpop.f32.mrb[0].mxu0
        %565 = vmatprep.mubr.f32.mxu0 0.0
        %566 = vmatmul.mubr.f32.gmra.mrb[0].mxu0 %v461
        %v567 = vpop.f32.mrb[0].mxu0
        %v568 = vadd.f32 0.0, %v567
        %v569 = vpop.f32.mrb[0].mxu0
        %570 = vmatprep.mubr.f32.mxu0 0.0
        %571 = vmatmul.mubr.f32.gmra.mrb[0].mxu0 %v462
        %v572 = vpop.f32.mrb[0].mxu0
        %v573 = vadd.f32 0.0, %v572
        %v574 = vpop.f32.mrb[0].mxu0
        %575 = vmatprep.mubr.f32.mxu0 0.0
        %576 = vmatmul.mubr.f32.gmra.mrb[0].mxu0 %v463
        %v577 = vpop.f32.mrb[0].mxu0
        %v578 = vadd.f32 0.0, %v577
        %v579 = vpop.f32.mrb[0].mxu0
        %580 = vmatprep.mubr.f32.mxu0 0.0
        %581 = vmatmul.mubr.f32.gmra.mrb[0].mxu0 %v464
        %v582 = vpop.f32.mrb[0].mxu0
        %v583 = vadd.f32 0.0, %v582
        %v584 = vpop.f32.mrb[0].mxu0
        %585 = vmatprep.mubr.f32.mxu0 0.0
        %586 = vmatmul.mubr.f32.gmra.mrb[0].mxu0 %v465
        %v587 = vpop.f32.mrb[0].mxu0
        %v588 = vadd.f32 0.0, %v587
        %v589 = vpop.f32.mrb[0].mxu0
        %590 = vmatprep.mubr.f32.mxu0 0.0
        %591 = vmatmul.mubr.f32.gmra.mrb[0].mxu0 %v466
        %v592 = vpop.f32.mrb[0].mxu0
        %v593 = vadd.f32 0.0, %v592
        %v594 = vpop.f32.mrb[0].mxu0
        %595 = vmatprep.mubr.f32.mxu0 0.0
        %596 = vmatmul.mubr.f32.gmra.mrb[0].mxu0 %v467
        %v597 = vpop.f32.mrb[0].mxu0
        %v598 = vadd.f32 0.0, %v597
        %v599 = vpop.f32.mrb[0].mxu0
        %600 = vmatprep.mubr.f32.mxu0 0.0
        %601 = vmatmul.mubr.f32.gmra.mrb[0].mxu0 %v468
        %v602 = vpop.f32.mrb[0].mxu0
        %v603 = vadd.f32 0.0, %v602
        %v604 = vpop.f32.mrb[0].mxu0
        %605 = vmatprep.mubr.f32.mxu0 0.0
        %606 = vmatmul.mubr.f32.gmra.mrb[0].mxu0 %v469
        %v607 = vpop.f32.mrb[0].mxu0
        %v608 = vadd.f32 0.0, %v607
        %v609 = vpop.f32.mrb[0].mxu0
        %610 = vmatprep.mubr.f32.mxu0 0.0
        %611 = vmatmul.mubr.f32.gmra.mrb[0].mxu0 %v470
        %v612 = vpop.f32.mrb[0].mxu0
        %v613 = vadd.f32 0.0, %v612
        %v614 = vpop.f32.mrb[0].mxu0
        %615 = vmatprep.mubr.f32.mxu0 0.0
        %616 = vmatmul.mubr.f32.gmra.mrb[0].mxu0 %v471
        %v617 = vpop.f32.mrb[0].mxu0
        %v618 = vadd.f32 0.0, %v617
        %v619 = vpop.f32.mrb[0].mxu0
        %620 = vmatprep.mubr.f32.mxu0 0.0
        %621 = vmatmul.mubr.f32.gmra.mrb[0].mxu0 %v472
        %v622 = vpop.f32.mrb[0].mxu0
        %v623 = vadd.f32 0.0, %v622
        %v624 = vpop.f32.mrb[0].mxu0
        %625 = vmatprep.mubr.f32.mxu0 0.0
        %626 = vmatmul.mubr.f32.gmra.mrb[0].mxu0 %v473
        %v627 = vpop.f32.mrb[0].mxu0
        %v628 = vadd.f32 0.0, %v627
        %v629 = vpop.f32.mrb[0].mxu0
        %630 = vmatprep.mubr.f32.mxu0 0.0
        %631 = vmatmul.mubr.f32.gmra.mrb[0].mxu0 %v474
        %v632 = vpop.f32.mrb[0].mxu0
        %v633 = vadd.f32 0.0, %v632
        %v634 = vpop.f32.mrb[0].mxu0
        %635 = vdwg.mxu0
        %v636 = vadd.f32 %v443, %v558
        %v637 = vadd.f32 %v444, %v563
        %v638 = vadd.f32 %v445, %v568
        %v639 = vadd.f32 %v446, %v573
        %v640 = vadd.f32 %v447, %v578
        %v641 = vadd.f32 %v448, %v583
        %v642 = vadd.f32 %v449, %v588
        %v643 = vadd.f32 %v450, %v593
        %v644 = vadd.f32 %v451, %v598
        %v645 = vadd.f32 %v452, %v603
        %v646 = vadd.f32 %v453, %v608
        %v647 = vadd.f32 %v454, %v613
        %v648 = vadd.f32 %v455, %v618
        %v649 = vadd.f32 %v456, %v623
        %v650 = vadd.f32 %v457, %v628
        %v651 = vadd.f32 %v458, %v633
        %652 = vst [vmem:[#allocation2] sm:$0xff] %v636
        %653 = vst [vmem:[#allocation2 + $0x8] sm:$0xff] %v637
        %654 = vst [vmem:[#allocation2 + $0x10] sm:$0xff] %v638
        %655 = vst [vmem:[#allocation2 + $0x18] sm:$0xff] %v639
        %656 = vst [vmem:[#allocation2 + $0x20] sm:$0xff] %v640
        %657 = vst [vmem:[#allocation2 + $0x28] sm:$0xff] %v641
        %658 = vst [vmem:[#allocation2 + $0x30] sm:$0xff] %v642
        %659 = vst [vmem:[#allocation2 + $0x38] sm:$0xff] %v643
        %660 = vst [vmem:[#allocation2 + $0x40] sm:$0xff] %v644
        %661 = vst [vmem:[#allocation2 + $0x48] sm:$0xff] %v645
        %662 = vst [vmem:[#allocation2 + $0x50] sm:$0xff] %v646
        %663 = vst [vmem:[#allocation2 + $0x58] sm:$0xff] %v647
        %664 = vst [vmem:[#allocation2 + $0x60] sm:$0xff] %v648
        %665 = vst [vmem:[#allocation2 + $0x68] sm:$0xff] %v649
        %666 = vst [vmem:[#allocation2 + $0x70] sm:$0xff] %v650
        %667 = vst [vmem:[#allocation2 + $0x78] sm:$0xff] %v651
        %p668 = scmp.eq.s32.totalorder %s23, 2
        // Predicated region
        $region83: #{ngcf_forward.2} parent=73 // pred_check
          %p669 = pneg %p668
        $region84: #{ngcf_forward.2} parent=73 // pred_check_branch
          %671 = sbr.rel (%p669) target = $region86
        $region85: #{ngcf_forward.2} parent=73 // pred_region
          %v672 = vld [vmem:[#allocation2] sm:$0xff]
          %v673 = vld [vmem:[#allocation2 + $0x8] sm:$0xff]
          %v674 = vld [vmem:[#allocation2 + $0x10] sm:$0xff]
          %v675 = vld [vmem:[#allocation2 + $0x18] sm:$0xff]
          %v676 = vld [vmem:[#allocation2 + $0x20] sm:$0xff]
          %v677 = vld [vmem:[#allocation2 + $0x28] sm:$0xff]
          %v678 = vld [vmem:[#allocation2 + $0x30] sm:$0xff]
          %v679 = vld [vmem:[#allocation2 + $0x38] sm:$0xff]
          %v680 = vld [vmem:[#allocation2 + $0x40] sm:$0xff]
          %v681 = vld [vmem:[#allocation2 + $0x48] sm:$0xff]
          %v682 = vld [vmem:[#allocation2 + $0x50] sm:$0xff]
          %v683 = vld [vmem:[#allocation2 + $0x58] sm:$0xff]
          %v684 = vld [vmem:[#allocation2 + $0x60] sm:$0xff]
          %v685 = vld [vmem:[#allocation2 + $0x68] sm:$0xff]
          %v686 = vld [vmem:[#allocation2 + $0x70] sm:$0xff]
          %v687 = vld [vmem:[#allocation2 + $0x78] sm:$0xff]
          %v688 = vld [vmem:[%s409] sm:$0xff]
          %v689 = vld [vmem:[%s409 + $0x8] sm:$0xff]
          %v690 = vld [vmem:[%s409 + $0x10] sm:$0xff]
          %v691 = vld [vmem:[%s409 + $0x18] sm:$0xff]
          %v692 = vld [vmem:[%s409 + $0x20] sm:$0xff]
          %v693 = vld [vmem:[%s409 + $0x28] sm:$0xff]
          %v694 = vld [vmem:[%s409 + $0x30] sm:$0xff]
          %v695 = vld [vmem:[%s409 + $0x38] sm:$0xff]
          %v696 = vld [vmem:[%s409 + $0x40] sm:$0xff]
          %v697 = vld [vmem:[%s409 + $0x48] sm:$0xff]
          %v698 = vld [vmem:[%s409 + $0x50] sm:$0xff]
          %v699 = vld [vmem:[%s409 + $0x58] sm:$0xff]
          %v700 = vld [vmem:[%s409 + $0x60] sm:$0xff]
          %v701 = vld [vmem:[%s409 + $0x68] sm:$0xff]
          %v702 = vld [vmem:[%s409 + $0x70] sm:$0xff]
          %v703 = vld [vmem:[%s409 + $0x78] sm:$0xff]
          %v704 = vmul.f32 %v688, %v672
          %v705 = vmul.f32 %v689, %v673
          %v706 = vmul.f32 %v690, %v674
          %v707 = vmul.f32 %v691, %v675
          %v708 = vmul.f32 %v692, %v676
          %v709 = vmul.f32 %v693, %v677
          %v710 = vmul.f32 %v694, %v678
          %v711 = vmul.f32 %v695, %v679
          %v712 = vmul.f32 %v696, %v680
          %v713 = vmul.f32 %v697, %v681
          %v714 = vmul.f32 %v698, %v682
          %v715 = vmul.f32 %v699, %v683
          %v716 = vmul.f32 %v700, %v684
          %v717 = vmul.f32 %v701, %v685
          %v718 = vmul.f32 %v702, %v686
          %v719 = vmul.f32 %v703, %v687
          %v720 = vld [vmem:[%s3] sm:$0xff]
          %v721 = vld [vmem:[%s3 + $0x8] sm:$0xff]
          %v722 = vld [vmem:[%s3 + $0x10] sm:$0xff]
          %v723 = vld [vmem:[%s3 + $0x18] sm:$0xff]
          %v724 = vld [vmem:[%s3 + $0x20] sm:$0xff]
          %v725 = vld [vmem:[%s3 + $0x28] sm:$0xff]
          %v726 = vld [vmem:[%s3 + $0x30] sm:$0xff]
          %v727 = vld [vmem:[%s3 + $0x38] sm:$0xff]
          %v728 = vld [vmem:[%s3 + $0x40] sm:$0xff]
          %v729 = vld [vmem:[%s3 + $0x48] sm:$0xff]
          %v730 = vld [vmem:[%s3 + $0x50] sm:$0xff]
          %v731 = vld [vmem:[%s3 + $0x58] sm:$0xff]
          %v732 = vld [vmem:[%s3 + $0x60] sm:$0xff]
          %v733 = vld [vmem:[%s3 + $0x68] sm:$0xff]
          %v734 = vld [vmem:[%s3 + $0x70] sm:$0xff]
          %v735 = vld [vmem:[%s3 + $0x78] sm:$0xff]
          %v736 = vld [vmem:[%s3 + $0x80] sm:$0xff]
          %v737 = vld [vmem:[%s3 + $0x88] sm:$0xff]
          %v738 = vld [vmem:[%s3 + $0x90] sm:$0xff]
          %v739 = vld [vmem:[%s3 + $0x98] sm:$0xff]
          %v740 = vld [vmem:[%s3 + $0xa0] sm:$0xff]
          %v741 = vld [vmem:[%s3 + $0xa8] sm:$0xff]
          %v742 = vld [vmem:[%s3 + $0xb0] sm:$0xff]
          %v743 = vld [vmem:[%s3 + $0xb8] sm:$0xff]
          %v744 = vld [vmem:[%s3 + $0xc0] sm:$0xff]
          %v745 = vld [vmem:[%s3 + $0xc8] sm:$0xff]
          %v746 = vld [vmem:[%s3 + $0xd0] sm:$0xff]
          %v747 = vld [vmem:[%s3 + $0xd8] sm:$0xff]
          %v748 = vld [vmem:[%s3 + $0xe0] sm:$0xff]
          %v749 = vld [vmem:[%s3 + $0xe8] sm:$0xff]
          %v750 = vld [vmem:[%s3 + $0xf0] sm:$0xff]
          %v751 = vld [vmem:[%s3 + $0xf8] sm:$0xff]
          %v752 = vld [vmem:[%s4] sm:$0x1]
          %v754 = vlaneseq
          %v755 = vshrl.u32 %v754, 7
          %v756 = vsub.s32 0, %v755
          %v757 = vrot.slane %v752, %v756
          %759 = vmatprep.subr.mxu0 0.0
          %760 = vmatpush1.msra.mxu0 %v720
          %761 = vmatprep.subr.mxu0 0.0
          %762 = vmatpush1.msra.mxu0 %v721
          %763 = vmatprep.subr.mxu0 0.0
          %764 = vmatpush1.msra.mxu0 %v722
          %765 = vmatprep.subr.mxu0 0.0
          %766 = vmatpush1.msra.mxu0 %v723
          %767 = vmatprep.subr.mxu0 0.0
          %768 = vmatpush1.msra.mxu0 %v724
          %769 = vmatprep.subr.mxu0 0.0
          %770 = vmatpush1.msra.mxu0 %v725
          %771 = vmatprep.subr.mxu0 0.0
          %772 = vmatpush1.msra.mxu0 %v726
          %773 = vmatprep.subr.mxu0 0.0
          %774 = vmatpush1.msra.mxu0 %v727
          %775 = vmatprep.subr.mxu0 0.0
          %776 = vmatpush1.msra.mxu0 %v728
          %777 = vmatprep.subr.mxu0 0.0
          %778 = vmatpush1.msra.mxu0 %v729
          %779 = vmatprep.subr.mxu0 0.0
          %780 = vmatpush1.msra.mxu0 %v730
          %781 = vmatprep.subr.mxu0 0.0
          %782 = vmatpush1.msra.mxu0 %v731
          %783 = vmatprep.subr.mxu0 0.0
          %784 = vmatpush1.msra.mxu0 %v732
          %785 = vmatprep.subr.mxu0 0.0
          %786 = vmatpush1.msra.mxu0 %v733
          %787 = vmatprep.subr.mxu0 0.0
          %788 = vmatpush1.msra.mxu0 %v734
          %789 = vmatprep.subr.mxu0 0.0
          %790 = vmatpush1.msra.mxu0 %v735
          %791 = vmatprep.subr.mxu0 0.0
          %792 = vmatpush1.msra.mxu0 %v736
          %793 = vmatprep.subr.mxu0 0.0
          %794 = vmatpush1.msra.mxu0 %v737
          %795 = vmatprep.subr.mxu0 0.0
          %796 = vmatpush1.msra.mxu0 %v738
          %797 = vmatprep.subr.mxu0 0.0
          %798 = vmatpush1.msra.mxu0 %v739
          %799 = vmatprep.subr.mxu0 0.0
          %800 = vmatpush1.msra.mxu0 %v740
          %801 = vmatprep.subr.mxu0 0.0
          %802 = vmatpush1.msra.mxu0 %v741
          %803 = vmatprep.subr.mxu0 0.0
          %804 = vmatpush1.msra.mxu0 %v742
          %805 = vmatprep.subr.mxu0 0.0
          %806 = vmatpush1.msra.mxu0 %v743
          %807 = vmatprep.subr.mxu0 0.0
          %808 = vmatpush1.msra.mxu0 %v744
          %809 = vmatprep.subr.mxu0 0.0
          %810 = vmatpush1.msra.mxu0 %v745
          %811 = vmatprep.subr.mxu0 0.0
          %812 = vmatpush1.msra.mxu0 %v746
          %813 = vmatprep.subr.mxu0 0.0
          %814 = vmatpush1.msra.mxu0 %v747
          %815 = vmatprep.subr.mxu0 0.0
          %816 = vmatpush1.msra.mxu0 %v748
          %817 = vmatprep.subr.mxu0 0.0
          %818 = vmatpush1.msra.mxu0 %v749
          %819 = vmatprep.subr.mxu0 0.0
          %820 = vmatpush1.msra.mxu0 %v750
          %821 = vmatprep.subr.mxu0 0.0
          %822 = vmatpush1.msra.mxu0 %v751
          %823 = vmatprep.mubr.f32.mxu0 %v704
          %824 = vmatmul.mubr.f32.gmra.mrb[0].mxu0 %v672
          %v825 = vpop.f32.mrb[0].mxu0
          %v826 = vadd.f32 %v757, %v825
          %v827 = vpop.f32.mrb[0].mxu0
          %828 = vmatprep.mubr.f32.mxu0 %v705
          %829 = vmatmul.mubr.f32.gmra.mrb[0].mxu0 %v673
          %v830 = vpop.f32.mrb[0].mxu0
          %v831 = vadd.f32 %v757, %v830
          %v832 = vpop.f32.mrb[0].mxu0
          %833 = vmatprep.mubr.f32.mxu0 %v706
          %834 = vmatmul.mubr.f32.gmra.mrb[0].mxu0 %v674
          %v835 = vpop.f32.mrb[0].mxu0
          %v836 = vadd.f32 %v757, %v835
          %v837 = vpop.f32.mrb[0].mxu0
          %838 = vmatprep.mubr.f32.mxu0 %v707
          %839 = vmatmul.mubr.f32.gmra.mrb[0].mxu0 %v675
          %v840 = vpop.f32.mrb[0].mxu0
          %v841 = vadd.f32 %v757, %v840
          %v842 = vpop.f32.mrb[0].mxu0
          %843 = vmatprep.mubr.f32.mxu0 %v708
          %844 = vmatmul.mubr.f32.gmra.mrb[0].mxu0 %v676
          %v845 = vpop.f32.mrb[0].mxu0
          %v846 = vadd.f32 %v757, %v845
          %v847 = vpop.f32.mrb[0].mxu0
          %848 = vmatprep.mubr.f32.mxu0 %v709
          %849 = vmatmul.mubr.f32.gmra.mrb[0].mxu0 %v677
          %v850 = vpop.f32.mrb[0].mxu0
          %v851 = vadd.f32 %v757, %v850
          %v852 = vpop.f32.mrb[0].mxu0
          %853 = vmatprep.mubr.f32.mxu0 %v710
          %854 = vmatmul.mubr.f32.gmra.mrb[0].mxu0 %v678
          %v855 = vpop.f32.mrb[0].mxu0
          %v856 = vadd.f32 %v757, %v855
          %v857 = vpop.f32.mrb[0].mxu0
          %858 = vmatprep.mubr.f32.mxu0 %v711
          %859 = vmatmul.mubr.f32.gmra.mrb[0].mxu0 %v679
          %v860 = vpop.f32.mrb[0].mxu0
          %v861 = vadd.f32 %v757, %v860
          %v862 = vpop.f32.mrb[0].mxu0
          %863 = vmatprep.mubr.f32.mxu0 %v712
          %864 = vmatmul.mubr.f32.gmra.mrb[0].mxu0 %v680
          %v865 = vpop.f32.mrb[0].mxu0
          %v866 = vadd.f32 %v757, %v865
          %v867 = vpop.f32.mrb[0].mxu0
          %868 = vmatprep.mubr.f32.mxu0 %v713
          %869 = vmatmul.mubr.f32.gmra.mrb[0].mxu0 %v681
          %v870 = vpop.f32.mrb[0].mxu0
          %v871 = vadd.f32 %v757, %v870
          %v872 = vpop.f32.mrb[0].mxu0
          %873 = vmatprep.mubr.f32.mxu0 %v714
          %874 = vmatmul.mubr.f32.gmra.mrb[0].mxu0 %v682
          %v875 = vpop.f32.mrb[0].mxu0
          %v876 = vadd.f32 %v757, %v875
          %v877 = vpop.f32.mrb[0].mxu0
          %878 = vmatprep.mubr.f32.mxu0 %v715
          %879 = vmatmul.mubr.f32.gmra.mrb[0].mxu0 %v683
          %v880 = vpop.f32.mrb[0].mxu0
          %v881 = vadd.f32 %v757, %v880
          %v882 = vpop.f32.mrb[0].mxu0
          %883 = vmatprep.mubr.f32.mxu0 %v716
          %884 = vmatmul.mubr.f32.gmra.mrb[0].mxu0 %v684
          %v885 = vpop.f32.mrb[0].mxu0
          %v886 = vadd.f32 %v757, %v885
          %v887 = vpop.f32.mrb[0].mxu0
          %888 = vmatprep.mubr.f32.mxu0 %v717
          %889 = vmatmul.mubr.f32.gmra.mrb[0].mxu0 %v685
          %v890 = vpop.f32.mrb[0].mxu0
          %v891 = vadd.f32 %v757, %v890
          %v892 = vpop.f32.mrb[0].mxu0
          %893 = vmatprep.mubr.f32.mxu0 %v718
          %894 = vmatmul.mubr.f32.gmra.mrb[0].mxu0 %v686
          %v895 = vpop.f32.mrb[0].mxu0
          %v896 = vadd.f32 %v757, %v895
          %v897 = vpop.f32.mrb[0].mxu0
          %898 = vmatprep.mubr.f32.mxu0 %v719
          %899 = vmatmul.mubr.f32.gmra.mrb[0].mxu0 %v687
          %v900 = vpop.f32.mrb[0].mxu0
          %v901 = vadd.f32 %v757, %v900
          %v902 = vpop.f32.mrb[0].mxu0
          %903 = vdwg.mxu0
          %vm904 = vcmp.ge.f32.partialorder %v826, 0.0
          %vm905 = vcmp.ge.f32.partialorder %v831, 0.0
          %vm906 = vcmp.ge.f32.partialorder %v836, 0.0
          %vm907 = vcmp.ge.f32.partialorder %v841, 0.0
          %vm908 = vcmp.ge.f32.partialorder %v846, 0.0
          %vm909 = vcmp.ge.f32.partialorder %v851, 0.0
          %vm910 = vcmp.ge.f32.partialorder %v856, 0.0
          %vm911 = vcmp.ge.f32.partialorder %v861, 0.0
          %vm912 = vcmp.ge.f32.partialorder %v866, 0.0
          %vm913 = vcmp.ge.f32.partialorder %v871, 0.0
          %vm914 = vcmp.ge.f32.partialorder %v876, 0.0
          %vm915 = vcmp.ge.f32.partialorder %v881, 0.0
          %vm916 = vcmp.ge.f32.partialorder %v886, 0.0
          %vm917 = vcmp.ge.f32.partialorder %v891, 0.0
          %vm918 = vcmp.ge.f32.partialorder %v896, 0.0
          %vm919 = vcmp.ge.f32.partialorder %v901, 0.0
          %v920 = vmul.f32 %v826, 0.2
          %v921 = vmul.f32 %v831, 0.2
          %v922 = vmul.f32 %v836, 0.2
          %v923 = vmul.f32 %v841, 0.2
          %v924 = vmul.f32 %v846, 0.2
          %v925 = vmul.f32 %v851, 0.2
          %v926 = vmul.f32 %v856, 0.2
          %v927 = vmul.f32 %v861, 0.2
          %v928 = vmul.f32 %v866, 0.2
          %v929 = vmul.f32 %v871, 0.2
          %v930 = vmul.f32 %v876, 0.2
          %v931 = vmul.f32 %v881, 0.2
          %v932 = vmul.f32 %v886, 0.2
          %v933 = vmul.f32 %v891, 0.2
          %v934 = vmul.f32 %v896, 0.2
          %v935 = vmul.f32 %v901, 0.2
          %v936 = vsel %vm904, %v826, %v920
          %v937 = vsel %vm905, %v831, %v921
          %v938 = vsel %vm906, %v836, %v922
          %v939 = vsel %vm907, %v841, %v923
          %v940 = vsel %vm908, %v846, %v924
          %v941 = vsel %vm909, %v851, %v925
          %v942 = vsel %vm910, %v856, %v926
          %v943 = vsel %vm911, %v861, %v927
          %v944 = vsel %vm912, %v866, %v928
          %v945 = vsel %vm913, %v871, %v929
          %v946 = vsel %vm914, %v876, %v930
          %v947 = vsel %vm915, %v881, %v931
          %v948 = vsel %vm916, %v886, %v932
          %v949 = vsel %vm917, %v891, %v933
          %v950 = vsel %vm918, %v896, %v934
          %v951 = vsel %vm919, %v901, %v935
          %952 = vst [vmem:[%s415] sm:$0xff] %v936
          %953 = vst [vmem:[%s415 + $0x8] sm:$0xff] %v937
          %954 = vst [vmem:[%s415 + $0x10] sm:$0xff] %v938
          %955 = vst [vmem:[%s415 + $0x18] sm:$0xff] %v939
          %956 = vst [vmem:[%s415 + $0x20] sm:$0xff] %v940
          %957 = vst [vmem:[%s415 + $0x28] sm:$0xff] %v941
          %958 = vst [vmem:[%s415 + $0x30] sm:$0xff] %v942
          %959 = vst [vmem:[%s415 + $0x38] sm:$0xff] %v943
          %960 = vst [vmem:[%s415 + $0x40] sm:$0xff] %v944
          %961 = vst [vmem:[%s415 + $0x48] sm:$0xff] %v945
          %962 = vst [vmem:[%s415 + $0x50] sm:$0xff] %v946
          %963 = vst [vmem:[%s415 + $0x58] sm:$0xff] %v947
          %964 = vst [vmem:[%s415 + $0x60] sm:$0xff] %v948
          %965 = vst [vmem:[%s415 + $0x68] sm:$0xff] %v949
          %966 = vst [vmem:[%s415 + $0x70] sm:$0xff] %v950
          %967 = vst [vmem:[%s415 + $0x78] sm:$0xff] %v951
          %v968 = vmul.f32 %v936, %v936
          %v969 = vmul.f32 %v937, %v937
          %v970 = vmul.f32 %v938, %v938
          %v971 = vmul.f32 %v939, %v939
          %v972 = vmul.f32 %v940, %v940
          %v973 = vmul.f32 %v941, %v941
          %v974 = vmul.f32 %v942, %v942
          %v975 = vmul.f32 %v943, %v943
          %v976 = vmul.f32 %v944, %v944
          %v977 = vmul.f32 %v945, %v945
          %v978 = vmul.f32 %v946, %v946
          %v979 = vmul.f32 %v947, %v947
          %v980 = vmul.f32 %v948, %v948
          %v981 = vmul.f32 %v949, %v949
          %v982 = vmul.f32 %v950, %v950
          %v983 = vmul.f32 %v951, %v951
          %984 = vadd.xlane.f32.xlu0 %v968
          %v985 = vpop.xlane.xlu0 %984
          %986 = vadd.xlane.f32.xlu0 %v969
          %v987 = vpop.xlane.xlu0 %986
          %988 = vadd.xlane.f32.xlu0 %v970
          %v989 = vpop.xlane.xlu0 %988
          %990 = vadd.xlane.f32.xlu0 %v971
          %v991 = vpop.xlane.xlu0 %990
          %992 = vadd.xlane.f32.xlu0 %v972
          %v993 = vpop.xlane.xlu0 %992
          %994 = vadd.xlane.f32.xlu0 %v973
          %v995 = vpop.xlane.xlu0 %994
          %996 = vadd.xlane.f32.xlu0 %v974
          %v997 = vpop.xlane.xlu0 %996
          %998 = vadd.xlane.f32.xlu0 %v975
          %v999 = vpop.xlane.xlu0 %998
          %1000 = vadd.xlane.f32.xlu0 %v976
          %v1001 = vpop.xlane.xlu0 %1000
          %1002 = vadd.xlane.f32.xlu0 %v977
          %v1003 = vpop.xlane.xlu0 %1002
          %1004 = vadd.xlane.f32.xlu0 %v978
          %v1005 = vpop.xlane.xlu0 %1004
          %1006 = vadd.xlane.f32.xlu0 %v979
          %v1007 = vpop.xlane.xlu0 %1006
          %1008 = vadd.xlane.f32.xlu0 %v980
          %v1009 = vpop.xlane.xlu0 %1008
          %1010 = vadd.xlane.f32.xlu0 %v981
          %v1011 = vpop.xlane.xlu0 %1010
          %1012 = vadd.xlane.f32.xlu0 %v982
          %v1013 = vpop.xlane.xlu0 %1012
          %1014 = vadd.xlane.f32.xlu0 %v983
          %v1015 = vpop.xlane.xlu0 %1014
          %v1016 = vmax.f32 %v985, 1e-24
          %v1017 = vmax.f32 %v987, 1e-24
          %v1018 = vmax.f32 %v989, 1e-24
          %v1019 = vmax.f32 %v991, 1e-24
          %v1020 = vmax.f32 %v993, 1e-24
          %v1021 = vmax.f32 %v995, 1e-24
          %v1022 = vmax.f32 %v997, 1e-24
          %v1023 = vmax.f32 %v999, 1e-24
          %v1024 = vmax.f32 %v1001, 1e-24
          %v1025 = vmax.f32 %v1003, 1e-24
          %v1026 = vmax.f32 %v1005, 1e-24
          %v1027 = vmax.f32 %v1007, 1e-24
          %v1028 = vmax.f32 %v1009, 1e-24
          %v1029 = vmax.f32 %v1011, 1e-24
          %v1030 = vmax.f32 %v1013, 1e-24
          %v1031 = vmax.f32 %v1015, 1e-24
          %v1032 = vrsqrt.pop %v1016
          %v1033 = vrsqrt.pop %v1017
          %v1034 = vrsqrt.pop %v1018
          %v1035 = vrsqrt.pop %v1019
          %v1036 = vrsqrt.pop %v1020
          %v1037 = vrsqrt.pop %v1021
          %v1038 = vrsqrt.pop %v1022
          %v1039 = vrsqrt.pop %v1023
          %v1040 = vrsqrt.pop %v1024
          %v1041 = vrsqrt.pop %v1025
          %v1042 = vrsqrt.pop %v1026
          %v1043 = vrsqrt.pop %v1027
          %v1044 = vrsqrt.pop %v1028
          %v1045 = vrsqrt.pop %v1029
          %v1046 = vrsqrt.pop %v1030
          %v1047 = vrsqrt.pop %v1031
          %v1048 = vmul.f32 %v936, %v1032
          %v1049 = vmul.f32 %v937, %v1033
          %v1050 = vmul.f32 %v938, %v1034
          %v1051 = vmul.f32 %v939, %v1035
          %v1052 = vmul.f32 %v940, %v1036
          %v1053 = vmul.f32 %v941, %v1037
          %v1054 = vmul.f32 %v942, %v1038
          %v1055 = vmul.f32 %v943, %v1039
          %v1056 = vmul.f32 %v944, %v1040
          %v1057 = vmul.f32 %v945, %v1041
          %v1058 = vmul.f32 %v946, %v1042
          %v1059 = vmul.f32 %v947, %v1043
          %v1060 = vmul.f32 %v948, %v1044
          %v1061 = vmul.f32 %v949, %v1045
          %v1062 = vmul.f32 %v950, %v1046
          %v1063 = vmul.f32 %v951, %v1047
          %1064 = vst [vmem:[%s421] sm:$0xff] %v1048
          %1065 = vst [vmem:[%s421 + $0x8] sm:$0xff] %v1049
          %1066 = vst [vmem:[%s421 + $0x10] sm:$0xff] %v1050
          %1067 = vst [vmem:[%s421 + $0x18] sm:$0xff] %v1051
          %1068 = vst [vmem:[%s421 + $0x20] sm:$0xff] %v1052
          %1069 = vst [vmem:[%s421 + $0x28] sm:$0xff] %v1053
          %1070 = vst [vmem:[%s421 + $0x30] sm:$0xff] %v1054
          %1071 = vst [vmem:[%s421 + $0x38] sm:$0xff] %v1055
          %1072 = vst [vmem:[%s421 + $0x40] sm:$0xff] %v1056
          %1073 = vst [vmem:[%s421 + $0x48] sm:$0xff] %v1057
          %1074 = vst [vmem:[%s421 + $0x50] sm:$0xff] %v1058
          %1075 = vst [vmem:[%s421 + $0x58] sm:$0xff] %v1059
          %1076 = vst [vmem:[%s421 + $0x60] sm:$0xff] %v1060
          %1077 = vst [vmem:[%s421 + $0x68] sm:$0xff] %v1061
          %1078 = vst [vmem:[%s421 + $0x70] sm:$0xff] %v1062
          %1079 = vst [vmem:[%s421 + $0x78] sm:$0xff] %v1063
        $region86: #{ngcf_forward.2} parent=73 // pred_fallthru
          _
        %s1080 = smul.u32 16, %s22
        %p1081 = scmp.lt.s32.totalorder %s1080, 47
        %s1082 = scalar_select %p1081, %s1080, 47
        %s1083 = smul.addr %s1082, 8
        %s1084 = scalar_lea.vmem %s5, %s1083
        %s1085 = smul.u32 16, %s22
        %p1086 = scmp.lt.s32.totalorder %s1085, 47
        %s1087 = scalar_select %p1086, %s1085, 47
        %s1088 = smul.addr %s1087, 8
        %s1089 = scalar_lea.vmem %s6, %s1088
        // Predicated region
        $region87: #{ngcf_forward.2} parent=73 // pred_check
          %p1090 = pneg %p170
        $region88: #{ngcf_forward.2} parent=73 // pred_check_branch
          %1092 = sbr.rel (%p1090) target = $region90
        $region89: #{ngcf_forward.2} parent=73 // pred_region
          %s1093 = smul.u32 16, %s22
        $region90: #{ngcf_forward.2} parent=73 // pred_fallthru
          _
        // Predicated region
        $region91: #{ngcf_forward.2} parent=73 // pred_check
          %p1094 = pneg %p196
        $region92: #{ngcf_forward.2} parent=73 // pred_check_branch
          %1096 = sbr.rel (%p1094) target = $region94
        $region93: #{ngcf_forward.2} parent=73 // pred_region
          %s1097 = smul.u32 16, %s22
        $region94: #{ngcf_forward.2} parent=73 // pred_fallthru
          _
      $region74: #{ngcf_forward.2} parent=5 // pred_fallthru
        _
      %p1098 = scmp.le.s32.totalorder 2, %s13
      // Predicated region
      $region95: #{ngcf_forward.2} parent=5 // pred_check
        %p1099 = pneg %p1098
      $region96: #{ngcf_forward.2} parent=5 // pred_check_branch
        %1101 = sbr.rel (%p1099) target = $region98
      $region97: #{ngcf_forward.2} parent=5 // pred_region
        %s1102 = ssub.s32 %s13, 2
        // Predicated region
        $region99: #{ngcf_forward.2} parent=97 // pred_check
          %p1103 = pneg %p176
        $region100: #{ngcf_forward.2} parent=97 // pred_check_branch
          %1105 = sbr.rel (%p1103) target = $region102
        $region101: #{ngcf_forward.2} parent=97 // pred_region
          %s1106 = smul.u32 16, %s24
          %p1107 = scmp.lt.s32.totalorder %s1106, 47
          %s1108 = scalar_select %p1107, %s1106, 47
          %s1109 = smul.addr %s1108, 8
          %s1110 = scalar_lea.vmem %s5, %s1109
        $region102: #{ngcf_forward.2} parent=97 // pred_fallthru
          _
        // Predicated region
        $region103: #{ngcf_forward.2} parent=97 // pred_check
          %p1111 = pneg %p202
        $region104: #{ngcf_forward.2} parent=97 // pred_check_branch
          %1113 = sbr.rel (%p1111) target = $region106
        $region105: #{ngcf_forward.2} parent=97 // pred_region
          %s1114 = smul.u32 16, %s24
          %p1115 = scmp.lt.s32.totalorder %s1114, 47
          %s1116 = scalar_select %p1115, %s1114, 47
          %s1117 = smul.addr %s1116, 8
          %s1118 = scalar_lea.vmem %s6, %s1117
        $region106: #{ngcf_forward.2} parent=97 // pred_fallthru
          _
      $region98: #{ngcf_forward.2} parent=5 // pred_fallthru
        _
    $region6: #{ngcf_forward.2} parent=1 // loop_footer
      %s17 = sadd.s32 1, %s13
    $region7: #{ngcf_forward.2} parent=1 // loop_footer_branch
      %12 = sbr.rel target = $region3
    $region8: #{ngcf_forward.2} parent=1 // loop_exit
      _

// kernel: ngcf_forward.3
$region0: #{ngcf_forward.3}
  #allocation0 [shape = 'u32[]', space=smem, size = 0x4, offset = 0x4, fixed_abs, tag = 'smem constant byte address 0x4 - core index']
  #allocation1 [shape = 'u32[144,128]{1,0:T(1,128)}', space=vmem, size = 0x12000, scoped, tag = 'internal scratch']
  #allocation2 [shape = 'f32[128,128]{1,0:T(8,128)}', space=vmem, size = 0x10000, scoped, tag = 'scratch operand']
  %s0 = inlined_call_operand.vmem [shape: f32[384,384], index: 0, kind: input, shape index: {}]
  %s1 = inlined_call_operand.vmem [shape: f32[384,128], index: 1, kind: input, shape index: {}, may-alias: {1,2}]
  %s2 = inlined_call_operand.vmem [shape: f32[384,128], index: 2, kind: input, shape index: {}, may-alias: {1,2}]
  %s3 = inlined_call_operand.vmem [shape: f32[256,128], index: 3, kind: input, shape index: {}]
  %s4 = inlined_call_operand.vmem [shape: f32[1,128], index: 4, kind: input, shape index: {}]
  %s5 = inlined_call_operand.hbm [shape: f32[384,128], index: 5, kind: output, shape index: {0}]
  %s6 = inlined_call_operand.vmem [shape: f32[384,128], index: 6, kind: output, shape index: {1}]
  %7 = xla_tuple %s5, %s6
  %s8 = sld [smem:[#allocation0]]
  $region107: #{ngcf_forward.3} parent=0
    _
  %s10 = ssub.s32 1, %s8
  %s11 = scalar_select 0, %s10, %s8
  $region1: #{ngcf_forward.3} parent=0
    #allocation3 [shape = 'u8[131072]{0}', space=vmem, size = 0x20000, scoped, tag = 'input window, operand 0']
    #allocation4 [shape = 'u8[131072]{0}', space=vmem, size = 0x20000, scoped, tag = 'output window, operand 0']
    #allocation5 [shape = 's32[2]{0}', space=sflag, size = 0x8, scoped, tag = 'scoped memory for ngcf_forward.3']
    %12 = vsyncpa [#allocation5], 0
    %s13 = scalar_lea.sflag [#allocation5], 1
    %14 = vsyncpa %s13, 0
    loop: start=0, step=1, limit=11
    $region2: #{ngcf_forward.3} parent=1 // loop_pre_header
      _
    $region3: #{ngcf_forward.3} parent=1 // loop_header
      %s16 = sphi 0, %s20
      %p17 = scmp.ge.s32.totalorder %s16, 11
      %s23 = sphi 0, %s35
      %s24 = sphi 0, %s31
      %s25 = sphi 0, %s23
      %s26 = sphi 0, %s24
      %s27 = sphi 0, %s25
      %s28 = sphi 0, %s26
      %s40 = sphi 0, %s42
      %s43 = sphi 0, %s40
      %s44 = sphi 0, %s43
      %s60 = sphi 0, %s44
      %s66 = sphi 0, %s68
      %s69 = sphi 0, %s66
      %s70 = sphi 0, %s69
      %s86 = sphi 0, %s70
      %s92 = sphi 0, %s94
      %s95 = sphi 0, %s92
      %s96 = sphi 0, %s95
      %s112 = sphi 0, %s96
      %s116 = sphi 0, %s116
      %s118 = sphi 0, %s116
      %s119 = sphi 0, %s118
      %s133 = sphi 0, %s119
      %s137 = sphi 0, %s137
      %s139 = sphi 0, %s137
      %s140 = sphi 0, %s139
      %s154 = sphi 0, %s140
      %s160 = sphi 0, %s162
      %s163 = sphi 0, %s160
      %s164 = sphi 0, %s163
      %s180 = sphi 0, %s164
      %s186 = sphi 0, %s188
      %s189 = sphi 0, %s186
      %s190 = sphi 0, %s189
      %s206 = sphi 0, %s190
    $region4: #{ngcf_forward.3} parent=1 // loop_header_branch
      %19 = sbr.rel (%p17) target = $region8
    $region5: #{ngcf_forward.3} parent=1 // loop_body
      %s21 = ssub.s32 %s16, 1
      %s22 = ssub.s32 %s16, 2
      %s29 = sadd.s32 1, %s24
      %p30 = scmp.ge.s32.totalorder %s29, 3
      %s31 = scalar_select %p30, 0, %s29
      %s32 = sadd.s32 1, %s23
      %s33 = scalar_select %p30, %s32, %s23
      %p34 = scmp.ge.s32.totalorder %s33, 3
      %s35 = scalar_select %p34, 0, %s33
      %s36 = ssub.s32 %s23, %s35
      %s37 = ssub.s32 %s24, %s31
      %s38 = sor.u32 %s36, %s37
      %p39 = scmp.eq.s32.totalorder %s38, 0
      %s41 = sadd.s32 %s40, 1
      %s42 = scalar_select %p39, %s40, %s41
      %p45 = pneg %p39
      %p46 = scmp.eq.s32.totalorder %s16, 8
      %p47 = por %p45, %p46
      %p48 = scmp.ne.s32.totalorder %s40, %s43
      %p49 = scmp.eq.s32.totalorder %s16, 0
      %p50 = por %p48, %p49
      %p51 = scmp.ne.s32.totalorder %s40, %s43
      %p52 = scmp.eq.s32.totalorder %s21, 8
      %p53 = por %p51, %p52
      %p54 = scmp.ne.s32.totalorder %s43, %s44
      %p55 = scmp.eq.s32.totalorder %s21, 0
      %p56 = por %p54, %p55
      %p57 = scmp.ne.s32.totalorder %s43, %s44
      %p58 = scmp.eq.s32.totalorder %s22, 8
      %p59 = por %p57, %p58
      %p61 = scmp.ne.s32.totalorder %s44, %s60
      %p62 = scmp.eq.s32.totalorder %s22, 0
      %p63 = por %p61, %p62
      %s64 = ssub.s32 %s24, %s31
      %p65 = scmp.eq.s32.totalorder %s64, 0
      %s67 = sadd.s32 %s66, 1
      %s68 = scalar_select %p65, %s66, %s67
      %p71 = pneg %p65
      %p72 = scmp.eq.s32.totalorder %s16, 8
      %p73 = por %p71, %p72
      %p74 = scmp.ne.s32.totalorder %s66, %s69
      %p75 = scmp.eq.s32.totalorder %s16, 0
      %p76 = por %p74, %p75
      %p77 = scmp.ne.s32.totalorder %s66, %s69
      %p78 = scmp.eq.s32.totalorder %s21, 8
      %p79 = por %p77, %p78
      %p80 = scmp.ne.s32.totalorder %s69, %s70
      %p81 = scmp.eq.s32.totalorder %s21, 0
      %p82 = por %p80, %p81
      %p83 = scmp.ne.s32.totalorder %s69, %s70
      %p84 = scmp.eq.s32.totalorder %s22, 8
      %p85 = por %p83, %p84
      %p87 = scmp.ne.s32.totalorder %s70, %s86
      %p88 = scmp.eq.s32.totalorder %s22, 0
      %p89 = por %p87, %p88
      %s90 = ssub.s32 %s23, %s35
      %p91 = scmp.eq.s32.totalorder %s90, 0
      %s93 = sadd.s32 %s92, 1
      %s94 = scalar_select %p91, %s92, %s93
      %p97 = pneg %p91
      %p98 = scmp.eq.s32.totalorder %s16, 8
      %p99 = por %p97, %p98
      %p100 = scmp.ne.s32.totalorder %s92, %s95
      %p101 = scmp.eq.s32.totalorder %s16, 0
      %p102 = por %p100, %p101
      %p103 = scmp.ne.s32.totalorder %s92, %s95
      %p104 = scmp.eq.s32.totalorder %s21, 8
      %p105 = por %p103, %p104
      %p106 = scmp.ne.s32.totalorder %s95, %s96
      %p107 = scmp.eq.s32.totalorder %s21, 0
      %p108 = por %p106, %p107
      %p109 = scmp.ne.s32.totalorder %s95, %s96
      %p110 = scmp.eq.s32.totalorder %s22, 8
      %p111 = por %p109, %p110
      %p113 = scmp.ne.s32.totalorder %s96, %s112
      %p114 = scmp.eq.s32.totalorder %s22, 0
      %p115 = por %p113, %p114
      %s117 = sadd.s32 %s116, 1
      %p120 = scmp.eq.s32.totalorder %s16, 8
      %p121 = scmp.ne.s32.totalorder %s116, %s118
      %p122 = scmp.eq.s32.totalorder %s16, 0
      %p123 = por %p121, %p122
      %p124 = scmp.ne.s32.totalorder %s116, %s118
      %p125 = scmp.eq.s32.totalorder %s21, 8
      %p126 = por %p124, %p125
      %p127 = scmp.ne.s32.totalorder %s118, %s119
      %p128 = scmp.eq.s32.totalorder %s21, 0
      %p129 = por %p127, %p128
      %p130 = scmp.ne.s32.totalorder %s118, %s119
      %p131 = scmp.eq.s32.totalorder %s22, 8
      %p132 = por %p130, %p131
      %p134 = scmp.ne.s32.totalorder %s119, %s133
      %p135 = scmp.eq.s32.totalorder %s22, 0
      %p136 = por %p134, %p135
      %s138 = sadd.s32 %s137, 1
      %p141 = scmp.eq.s32.totalorder %s16, 8
      %p142 = scmp.ne.s32.totalorder %s137, %s139
      %p143 = scmp.eq.s32.totalorder %s16, 0
      %p144 = por %p142, %p143
      %p145 = scmp.ne.s32.totalorder %s137, %s139
      %p146 = scmp.eq.s32.totalorder %s21, 8
      %p147 = por %p145, %p146
      %p148 = scmp.ne.s32.totalorder %s139, %s140
      %p149 = scmp.eq.s32.totalorder %s21, 0
      %p150 = por %p148, %p149
      %p151 = scmp.ne.s32.totalorder %s139, %s140
      %p152 = scmp.eq.s32.totalorder %s22, 8
      %p153 = por %p151, %p152
      %p155 = scmp.ne.s32.totalorder %s140, %s154
      %p156 = scmp.eq.s32.totalorder %s22, 0
      %p157 = por %p155, %p156
      %s158 = ssub.s32 %s23, %s35
      %p159 = scmp.eq.s32.totalorder %s158, 0
      %s161 = sadd.s32 %s160, 1
      %s162 = scalar_select %p159, %s160, %s161
      %p165 = pneg %p159
      %p166 = scmp.eq.s32.totalorder %s16, 8
      %p167 = por %p165, %p166
      %p168 = scmp.ne.s32.totalorder %s160, %s163
      %p169 = scmp.eq.s32.totalorder %s16, 0
      %p170 = por %p168, %p169
      %p171 = scmp.ne.s32.totalorder %s160, %s163
      %p172 = scmp.eq.s32.totalorder %s21, 8
      %p173 = por %p171, %p172
      %p174 = scmp.ne.s32.totalorder %s163, %s164
      %p175 = scmp.eq.s32.totalorder %s21, 0
      %p176 = por %p174, %p175
      %p177 = scmp.ne.s32.totalorder %s163, %s164
      %p178 = scmp.eq.s32.totalorder %s22, 8
      %p179 = por %p177, %p178
      %p181 = scmp.ne.s32.totalorder %s164, %s180
      %p182 = scmp.eq.s32.totalorder %s22, 0
      %p183 = por %p181, %p182
      %s184 = ssub.s32 %s23, %s35
      %p185 = scmp.eq.s32.totalorder %s184, 0
      %s187 = sadd.s32 %s186, 1
      %s188 = scalar_select %p185, %s186, %s187
      %p191 = pneg %p185
      %p192 = scmp.eq.s32.totalorder %s16, 8
      %p193 = por %p191, %p192
      %p194 = scmp.ne.s32.totalorder %s186, %s189
      %p195 = scmp.eq.s32.totalorder %s16, 0
      %p196 = por %p194, %p195
      %p197 = scmp.ne.s32.totalorder %s186, %s189
      %p198 = scmp.eq.s32.totalorder %s21, 8
      %p199 = por %p197, %p198
      %p200 = scmp.ne.s32.totalorder %s189, %s190
      %p201 = scmp.eq.s32.totalorder %s21, 0
      %p202 = por %p200, %p201
      %p203 = scmp.ne.s32.totalorder %s189, %s190
      %p204 = scmp.eq.s32.totalorder %s22, 8
      %p205 = por %p203, %p204
      %p207 = scmp.ne.s32.totalorder %s190, %s206
      %p208 = scmp.eq.s32.totalorder %s22, 0
      %p209 = por %p207, %p208
      %p210 = scmp.le.s32.totalorder 1, %s16
      %p211 = scmp.lt.s32.totalorder %s16, 10
      %p212 = pnand %p210, %p211
      %p213 = pneg %p212
      // Predicated region
      $region9: #{ngcf_forward.3} parent=5 // pred_check
        _
      $region10: #{ngcf_forward.3} parent=5 // pred_check_branch
        %215 = sbr.rel (%p212) target = $region12
      $region11: #{ngcf_forward.3} parent=5 // pred_region
        %s216 = ssub.s32 %s16, 1
        // Predicated region
        $region13: #{ngcf_forward.3} parent=11 // pred_check
          %p217 = pneg %p129
        $region14: #{ngcf_forward.3} parent=11 // pred_check_branch
          %219 = sbr.rel (%p217) target = $region16
        $region15: #{ngcf_forward.3} parent=11 // pred_region
          _
        $region16: #{ngcf_forward.3} parent=11 // pred_fallthru
          _
        // Predicated region
        $region17: #{ngcf_forward.3} parent=11 // pred_check
          %p220 = pneg %p150
        $region18: #{ngcf_forward.3} parent=11 // pred_check_branch
          %222 = sbr.rel (%p220) target = $region20
        $region19: #{ngcf_forward.3} parent=11 // pred_region
          _
        $region20: #{ngcf_forward.3} parent=11 // pred_fallthru
          _
      $region12: #{ngcf_forward.3} parent=5 // pred_fallthru
        _
      %p223 = scmp.lt.s32.totalorder %s16, 9
      // Predicated region
      $region21: #{ngcf_forward.3} parent=5 // pred_check
        %p224 = pneg %p223
      $region22: #{ngcf_forward.3} parent=5 // pred_check_branch
        %226 = sbr.rel (%p224) target = $region24
      $region23: #{ngcf_forward.3} parent=5 // pred_region
        // Predicated region
        $region25: #{ngcf_forward.3} parent=23 // pred_check
          %p227 = pneg %p50
        $region26: #{ngcf_forward.3} parent=23 // pred_check_branch
          %229 = sbr.rel (%p227) target = $region28
        $region27: #{ngcf_forward.3} parent=23 // pred_region
          %s230 = sand.u32 %s40, 1
          %s231 = sand.u32 %s40, 1
          %s232 = smul.addr %s231, 128
          %s233 = scalar_lea.vmem [#allocation3], %s232
          %s234 = smul.u32 16, %s23
          %s235 = smul.addr %s234, 3
          %s236 = sadd.s32 %s24, %s235
          %s237 = smul.addr %s236, 8
          %s238 = scalar_lea.vmem %s0, %s237
          // Predicated region
          $region29: #{ngcf_forward.3} parent=27 // pred_check
            _
          $region30: #{ngcf_forward.3} parent=27 // pred_check_branch
            %240 = sbr.rel (0) target = $region32
          $region31: #{ngcf_forward.3} parent=27 // pred_region
            // Predicated region
            $region33: #{ngcf_forward.3} parent=31 // pred_check
              _
            $region34: #{ngcf_forward.3} parent=31 // pred_check_branch
              %242 = sbr.rel (0) target = $region36
            $region35: #{ngcf_forward.3} parent=31 // pred_region
              // Predicated region
              $region48: #{ngcf_forward.3} parent=35 // pred_check
                _
              $region49: #{ngcf_forward.3} parent=35 // pred_check_branch
                %287 = sbr.rel (0) target = $region51
              $region50: #{ngcf_forward.3} parent=35 // pred_region
                loop: start=0, step=1, limit=1
                $region52: #{ngcf_forward.3} parent=50 // loop_pre_header
                  _
                $region53: #{ngcf_forward.3} parent=50 // loop_header
                  %s289 = sphi 0, %s293
                  %p290 = scmp.ge.s32.totalorder %s289, 1
                  %s294 = sphi %s238, %s238
                  %s295 = sphi %s233, %s233
                $region54: #{ngcf_forward.3} parent=50 // loop_header_branch
                  %292 = sbr.rel (%p290) target = $region58
                $region55: #{ngcf_forward.3} parent=50 // loop_body
                  %v296 = vld [vmem:[%s294] sm:$0xff]
                  %297 = vst [vmem:[%s295] sm:$0xff] %v296
                  %v298 = vld [vmem:[%s294 + $0x18] sm:$0xff]
                  %299 = vst [vmem:[%s295 + $0x8] sm:$0xff] %v298
                  %v300 = vld [vmem:[%s294 + $0x30] sm:$0xff]
                  %301 = vst [vmem:[%s295 + $0x10] sm:$0xff] %v300
                  %v302 = vld [vmem:[%s294 + $0x48] sm:$0xff]
                  %303 = vst [vmem:[%s295 + $0x18] sm:$0xff] %v302
                  %v304 = vld [vmem:[%s294 + $0x60] sm:$0xff]
                  %305 = vst [vmem:[%s295 + $0x20] sm:$0xff] %v304
                  %v306 = vld [vmem:[%s294 + $0x78] sm:$0xff]
                  %307 = vst [vmem:[%s295 + $0x28] sm:$0xff] %v306
                  %v308 = vld [vmem:[%s294 + $0x90] sm:$0xff]
                  %309 = vst [vmem:[%s295 + $0x30] sm:$0xff] %v308
                  %v310 = vld [vmem:[%s294 + $0xa8] sm:$0xff]
                  %311 = vst [vmem:[%s295 + $0x38] sm:$0xff] %v310
                  %v312 = vld [vmem:[%s294 + $0xc0] sm:$0xff]
                  %313 = vst [vmem:[%s295 + $0x40] sm:$0xff] %v312
                  %v314 = vld [vmem:[%s294 + $0xd8] sm:$0xff]
                  %315 = vst [vmem:[%s295 + $0x48] sm:$0xff] %v314
                  %v316 = vld [vmem:[%s294 + $0xf0] sm:$0xff]
                  %317 = vst [vmem:[%s295 + $0x50] sm:$0xff] %v316
                  %v318 = vld [vmem:[%s294 + $0x108] sm:$0xff]
                  %319 = vst [vmem:[%s295 + $0x58] sm:$0xff] %v318
                  %v320 = vld [vmem:[%s294 + $0x120] sm:$0xff]
                  %321 = vst [vmem:[%s295 + $0x60] sm:$0xff] %v320
                  %v322 = vld [vmem:[%s294 + $0x138] sm:$0xff]
                  %323 = vst [vmem:[%s295 + $0x68] sm:$0xff] %v322
                  %v324 = vld [vmem:[%s294 + $0x150] sm:$0xff]
                  %325 = vst [vmem:[%s295 + $0x70] sm:$0xff] %v324
                  %v326 = vld [vmem:[%s294 + $0x168] sm:$0xff]
                  %327 = vst [vmem:[%s295 + $0x78] sm:$0xff] %v326
                $region56: #{ngcf_forward.3} parent=50 // loop_footer
                  %s293 = sadd.s32 1, %s289
                $region57: #{ngcf_forward.3} parent=50 // loop_footer_branch
                  %288 = sbr.rel target = $region53
                $region58: #{ngcf_forward.3} parent=50 // loop_exit
                  _
              $region51: #{ngcf_forward.3} parent=35 // pred_fallthru
                _
              // Predicated region
              $region59: #{ngcf_forward.3} parent=35 // pred_check
                _
              $region60: #{ngcf_forward.3} parent=35 // pred_check_branch
                %329 = sbr.rel target = $region62
              $region61: #{ngcf_forward.3} parent=35 // pred_region
                _
              $region62: #{ngcf_forward.3} parent=35 // pred_fallthru
                _
            $region36: #{ngcf_forward.3} parent=31 // pred_fallthru
              _
            // Predicated region
            $region37: #{ngcf_forward.3} parent=31 // pred_check
              _
            $region38: #{ngcf_forward.3} parent=31 // pred_check_branch
              %244 = sbr.rel target = $region40
            $region39: #{ngcf_forward.3} parent=31 // pred_region
              loop: start=0, step=1, limit=1
              $region41: #{ngcf_forward.3} parent=39 // loop_pre_header
                _
              $region42: #{ngcf_forward.3} parent=39 // loop_header
                %s247 = sphi 0, %s251
                %p248 = scmp.ge.s32.totalorder %s247, 1
                %s252 = sphi %s238, %s238
                %s253 = sphi %s233, %s233
              $region43: #{ngcf_forward.3} parent=39 // loop_header_branch
                %250 = sbr.rel (%p248) target = $region47
              $region44: #{ngcf_forward.3} parent=39 // loop_body
                %v254 = vld [vmem:[%s252] sm:$0xff]
                %255 = vst [vmem:[%s253] sm:$0xff] %v254
                %v256 = vld [vmem:[%s252 + $0x18] sm:$0xff]
                %257 = vst [vmem:[%s253 + $0x8] sm:$0xff] %v256
                %v258 = vld [vmem:[%s252 + $0x30] sm:$0xff]
                %259 = vst [vmem:[%s253 + $0x10] sm:$0xff] %v258
                %v260 = vld [vmem:[%s252 + $0x48] sm:$0xff]
                %261 = vst [vmem:[%s253 + $0x18] sm:$0xff] %v260
                %v262 = vld [vmem:[%s252 + $0x60] sm:$0xff]
                %263 = vst [vmem:[%s253 + $0x20] sm:$0xff] %v262
                %v264 = vld [vmem:[%s252 + $0x78] sm:$0xff]
                %265 = vst [vmem:[%s253 + $0x28] sm:$0xff] %v264
                %v266 = vld [vmem:[%s252 + $0x90] sm:$0xff]
                %267 = vst [vmem:[%s253 + $0x30] sm:$0xff] %v266
                %v268 = vld [vmem:[%s252 + $0xa8] sm:$0xff]
                %269 = vst [vmem:[%s253 + $0x38] sm:$0xff] %v268
                %v270 = vld [vmem:[%s252 + $0xc0] sm:$0xff]
                %271 = vst [vmem:[%s253 + $0x40] sm:$0xff] %v270
                %v272 = vld [vmem:[%s252 + $0xd8] sm:$0xff]
                %273 = vst [vmem:[%s253 + $0x48] sm:$0xff] %v272
                %v274 = vld [vmem:[%s252 + $0xf0] sm:$0xff]
                %275 = vst [vmem:[%s253 + $0x50] sm:$0xff] %v274
                %v276 = vld [vmem:[%s252 + $0x108] sm:$0xff]
                %277 = vst [vmem:[%s253 + $0x58] sm:$0xff] %v276
                %v278 = vld [vmem:[%s252 + $0x120] sm:$0xff]
                %279 = vst [vmem:[%s253 + $0x60] sm:$0xff] %v278
                %v280 = vld [vmem:[%s252 + $0x138] sm:$0xff]
                %281 = vst [vmem:[%s253 + $0x68] sm:$0xff] %v280
                %v282 = vld [vmem:[%s252 + $0x150] sm:$0xff]
                %283 = vst [vmem:[%s253 + $0x70] sm:$0xff] %v282
                %v284 = vld [vmem:[%s252 + $0x168] sm:$0xff]
                %285 = vst [vmem:[%s253 + $0x78] sm:$0xff] %v284
              $region45: #{ngcf_forward.3} parent=39 // loop_footer
                %s251 = sadd.s32 1, %s247
              $region46: #{ngcf_forward.3} parent=39 // loop_footer_branch
                %246 = sbr.rel target = $region42
              $region47: #{ngcf_forward.3} parent=39 // loop_exit
                _
            $region40: #{ngcf_forward.3} parent=31 // pred_fallthru
              _
          $region32: #{ngcf_forward.3} parent=27 // pred_fallthru
            _
          %330 = vnop
        $region28: #{ngcf_forward.3} parent=23 // pred_fallthru
          _
        // Predicated region
        $region63: #{ngcf_forward.3} parent=23 // pred_check
          %p331 = pneg %p76
        $region64: #{ngcf_forward.3} parent=23 // pred_check_branch
          %333 = sbr.rel (%p331) target = $region66
        $region65: #{ngcf_forward.3} parent=23 // pred_region
          %s334 = smul.u32 16, %s24
          %p335 = scmp.lt.s32.totalorder %s334, 47
          %s336 = scalar_select %p335, %s334, 47
          %s337 = smul.addr %s336, 8
          %s338 = scalar_lea.vmem %s1, %s337
          %s339 = smul.u32 16, %s24
        $region66: #{ngcf_forward.3} parent=23 // pred_fallthru
          _
        // Predicated region
        $region67: #{ngcf_forward.3} parent=23 // pred_check
          %p340 = pneg %p102
        $region68: #{ngcf_forward.3} parent=23 // pred_check_branch
          %342 = sbr.rel (%p340) target = $region70
        $region69: #{ngcf_forward.3} parent=23 // pred_region
          %s343 = smul.u32 16, %s23
          %p344 = scmp.lt.s32.totalorder %s343, 47
          %s345 = scalar_select %p344, %s343, 47
          %s346 = smul.addr %s345, 8
          %s347 = scalar_lea.vmem %s2, %s346
          %s348 = smul.u32 16, %s23
        $region70: #{ngcf_forward.3} parent=23 // pred_fallthru
          _
      $region24: #{ngcf_forward.3} parent=5 // pred_fallthru
        _
      %p349 = scmp.le.s32.totalorder 1, %s16
      %p350 = scmp.lt.s32.totalorder %s16, 10
      %p351 = pnand %p349, %p350
      %p352 = pneg %p351
      // Predicated region
      $region71: #{ngcf_forward.3} parent=5 // pred_check
        _
      $region72: #{ngcf_forward.3} parent=5 // pred_check_branch
        %354 = sbr.rel (%p351) target = $region74
      $region73: #{ngcf_forward.3} parent=5 // pred_region
        %s355 = ssub.s32 %s16, 1
        %s356 = sand.u32 %s43, 1
        %s357 = sand.u32 %s43, 1
        %s358 = smul.addr %s357, 128
        %s359 = scalar_lea.vmem [#allocation3], %s358
        // Predicated region
        $region75: #{ngcf_forward.3} parent=73 // pred_check
          %p360 = pneg %p56
        $region76: #{ngcf_forward.3} parent=73 // pred_check_branch
          %362 = sbr.rel (%p360) target = $region78
        $region77: #{ngcf_forward.3} parent=73 // pred_region
          _
        $region78: #{ngcf_forward.3} parent=73 // pred_fallthru
          _
        %s363 = sand.u32 %s43, 1
        %s364 = sand.u32 %s43, 1
        %s365 = smul.addr %s364, 128
        %s366 = scalar_lea.vmem [#allocation3], %s365
        %p367 = pneg %p56
        %p368 = pneg %p53
        %s369 = smul.u32 16, %s26
        %p370 = scmp.lt.s32.totalorder %s369, 47
        %s371 = scalar_select %p370, %s369, 47
        %s372 = smul.addr %s371, 8
        %s373 = scalar_lea.vmem %s1, %s372
        %p374 = pneg %p82
        %p375 = pneg %p79
        %s376 = smul.u32 16, %s25
        %p377 = scmp.lt.s32.totalorder %s376, 47
        %s378 = scalar_select %p377, %s376, 47
        %s379 = smul.addr %s378, 8
        %s380 = scalar_lea.vmem %s2, %s379
        %p381 = pneg %p108
        %p382 = pneg %p105
        %p383 = pneg %p129
        %p384 = pneg %p126
        %p385 = pneg %p150
        %p386 = pneg %p147
        %p387 = pneg %p176
        %p388 = pneg %p173
        %s389 = sand.u32 %s163, 1
        %s390 = scalar_lea.sflag [#allocation5], %s389
        %s391 = sand.u32 %s163, 1
        %s392 = smul.addr %s391, 128
        %s393 = scalar_lea.vmem [#allocation4], %s392
        %p394 = pneg %p202
        %p395 = pneg %p199
        %s396 = smul.u32 16, %s25
        %p397 = scmp.lt.s32.totalorder %s396, 47
        %s398 = scalar_select %p397, %s396, 47
        %s399 = smul.addr %s398, 8
        %s400 = scalar_lea.vmem %s6, %s399
        %s401 = smul.u32 16, %s25
        %s402 = smul.u32 16, %s26
        %p403 = scmp.lt.s32.totalorder %s402, 47
        %s404 = scalar_select %p403, %s402, 47
        %s405 = smul.addr %s404, 8
        %s406 = scalar_lea.vmem %s1, %s405
        %s407 = smul.u32 16, %s26
        %s408 = smul.u32 16, %s25
        %p409 = scmp.lt.s32.totalorder %s408, 47
        %s410 = scalar_select %p409, %s408, 47
        %s411 = smul.addr %s410, 8
        %s412 = scalar_lea.vmem %s2, %s411
        %s413 = smul.u32 16, %s25
        %s414 = smul.u32 16, %s25
        %s415 = smul.u32 16, %s25
        %p416 = scmp.lt.s32.totalorder %s415, 47
        %s417 = scalar_select %p416, %s415, 47
        %s418 = smul.addr %s417, 8
        %s419 = scalar_lea.vmem %s6, %s418
        %s420 = smul.u32 16, %s25
        %p421 = scmp.eq.s32.totalorder %s26, 0
        // Predicated region
        $region79: #{ngcf_forward.3} parent=73 // pred_check
          %p422 = pneg %p421
        $region80: #{ngcf_forward.3} parent=73 // pred_check_branch
          %424 = sbr.rel (%p422) target = $region82
        $region81: #{ngcf_forward.3} parent=73 // pred_region
          %425 = vst [vmem:[#allocation2] sm:$0xff] 0.0
          %426 = vst [vmem:[#allocation2 + $0x8] sm:$0xff] 0.0
          %427 = vst [vmem:[#allocation2 + $0x10] sm:$0xff] 0.0
          %428 = vst [vmem:[#allocation2 + $0x18] sm:$0xff] 0.0
          %429 = vst [vmem:[#allocation2 + $0x20] sm:$0xff] 0.0
          %430 = vst [vmem:[#allocation2 + $0x28] sm:$0xff] 0.0
          %431 = vst [vmem:[#allocation2 + $0x30] sm:$0xff] 0.0
          %432 = vst [vmem:[#allocation2 + $0x38] sm:$0xff] 0.0
          %433 = vst [vmem:[#allocation2 + $0x40] sm:$0xff] 0.0
          %434 = vst [vmem:[#allocation2 + $0x48] sm:$0xff] 0.0
          %435 = vst [vmem:[#allocation2 + $0x50] sm:$0xff] 0.0
          %436 = vst [vmem:[#allocation2 + $0x58] sm:$0xff] 0.0
          %437 = vst [vmem:[#allocation2 + $0x60] sm:$0xff] 0.0
          %438 = vst [vmem:[#allocation2 + $0x68] sm:$0xff] 0.0
          %439 = vst [vmem:[#allocation2 + $0x70] sm:$0xff] 0.0
          %440 = vst [vmem:[#allocation2 + $0x78] sm:$0xff] 0.0
        $region82: #{ngcf_forward.3} parent=73 // pred_fallthru
          _
        %v441 = vld [vmem:[#allocation2] sm:$0xff]
        %v442 = vld [vmem:[#allocation2 + $0x8] sm:$0xff]
        %v443 = vld [vmem:[#allocation2 + $0x10] sm:$0xff]
        %v444 = vld [vmem:[#allocation2 + $0x18] sm:$0xff]
        %v445 = vld [vmem:[#allocation2 + $0x20] sm:$0xff]
        %v446 = vld [vmem:[#allocation2 + $0x28] sm:$0xff]
        %v447 = vld [vmem:[#allocation2 + $0x30] sm:$0xff]
        %v448 = vld [vmem:[#allocation2 + $0x38] sm:$0xff]
        %v449 = vld [vmem:[#allocation2 + $0x40] sm:$0xff]
        %v450 = vld [vmem:[#allocation2 + $0x48] sm:$0xff]
        %v451 = vld [vmem:[#allocation2 + $0x50] sm:$0xff]
        %v452 = vld [vmem:[#allocation2 + $0x58] sm:$0xff]
        %v453 = vld [vmem:[#allocation2 + $0x60] sm:$0xff]
        %v454 = vld [vmem:[#allocation2 + $0x68] sm:$0xff]
        %v455 = vld [vmem:[#allocation2 + $0x70] sm:$0xff]
        %v456 = vld [vmem:[#allocation2 + $0x78] sm:$0xff]
        %v457 = vld [vmem:[%s359] sm:$0xff]
        %v458 = vld [vmem:[%s359 + $0x8] sm:$0xff]
        %v459 = vld [vmem:[%s359 + $0x10] sm:$0xff]
        %v460 = vld [vmem:[%s359 + $0x18] sm:$0xff]
        %v461 = vld [vmem:[%s359 + $0x20] sm:$0xff]
        %v462 = vld [vmem:[%s359 + $0x28] sm:$0xff]
        %v463 = vld [vmem:[%s359 + $0x30] sm:$0xff]
        %v464 = vld [vmem:[%s359 + $0x38] sm:$0xff]
        %v465 = vld [vmem:[%s359 + $0x40] sm:$0xff]
        %v466 = vld [vmem:[%s359 + $0x48] sm:$0xff]
        %v467 = vld [vmem:[%s359 + $0x50] sm:$0xff]
        %v468 = vld [vmem:[%s359 + $0x58] sm:$0xff]
        %v469 = vld [vmem:[%s359 + $0x60] sm:$0xff]
        %v470 = vld [vmem:[%s359 + $0x68] sm:$0xff]
        %v471 = vld [vmem:[%s359 + $0x70] sm:$0xff]
        %v472 = vld [vmem:[%s359 + $0x78] sm:$0xff]
        %v473 = vld [vmem:[%s406] sm:$0xff]
        %v474 = vld [vmem:[%s406 + $0x8] sm:$0xff]
        %v475 = vld [vmem:[%s406 + $0x10] sm:$0xff]
        %v476 = vld [vmem:[%s406 + $0x18] sm:$0xff]
        %v477 = vld [vmem:[%s406 + $0x20] sm:$0xff]
        %v478 = vld [vmem:[%s406 + $0x28] sm:$0xff]
        %v479 = vld [vmem:[%s406 + $0x30] sm:$0xff]
        %v480 = vld [vmem:[%s406 + $0x38] sm:$0xff]
        %v481 = vld [vmem:[%s406 + $0x40] sm:$0xff]
        %v482 = vld [vmem:[%s406 + $0x48] sm:$0xff]
        %v483 = vld [vmem:[%s406 + $0x50] sm:$0xff]
        %v484 = vld [vmem:[%s406 + $0x58] sm:$0xff]
        %v485 = vld [vmem:[%s406 + $0x60] sm:$0xff]
        %v486 = vld [vmem:[%s406 + $0x68] sm:$0xff]
        %v487 = vld [vmem:[%s406 + $0x70] sm:$0xff]
        %v488 = vld [vmem:[%s406 + $0x78] sm:$0xff]
        %489 = vmatprep.subr.mxu0 0.0
        %490 = vmatpush1.msra.mxu0 %v473
        %491 = vmatprep.subr.mxu0 0.0
        %492 = vmatpush1.msra.mxu0 %v474
        %493 = vmatprep.subr.mxu0 0.0
        %494 = vmatpush1.msra.mxu0 %v475
        %495 = vmatprep.subr.mxu0 0.0
        %496 = vmatpush1.msra.mxu0 %v476
        %497 = vmatprep.subr.mxu0 0.0
        %498 = vmatpush1.msra.mxu0 %v477
        %499 = vmatprep.subr.mxu0 0.0
        %500 = vmatpush1.msra.mxu0 %v478
        %501 = vmatprep.subr.mxu0 0.0
        %502 = vmatpush1.msra.mxu0 %v479
        %503 = vmatprep.subr.mxu0 0.0
        %504 = vmatpush1.msra.mxu0 %v480
        %505 = vmatprep.subr.mxu0 0.0
        %506 = vmatpush1.msra.mxu0 %v481
        %507 = vmatprep.subr.mxu0 0.0
        %508 = vmatpush1.msra.mxu0 %v482
        %509 = vmatprep.subr.mxu0 0.0
        %510 = vmatpush1.msra.mxu0 %v483
        %511 = vmatprep.subr.mxu0 0.0
        %512 = vmatpush1.msra.mxu0 %v484
        %513 = vmatprep.subr.mxu0 0.0
        %514 = vmatpush1.msra.mxu0 %v485
        %515 = vmatprep.subr.mxu0 0.0
        %516 = vmatpush1.msra.mxu0 %v486
        %517 = vmatprep.subr.mxu0 0.0
        %518 = vmatpush1.msra.mxu0 %v487
        %519 = vmatprep.subr.mxu0 0.0
        %520 = vmatpush1.msra.mxu0 %v488
        %521 = vmatprep.subr.mxu0 0.0
        %522 = vmatpush1.msra.mxu0 0.0
        %523 = vmatprep.subr.mxu0 0.0
        %524 = vmatpush1.msra.mxu0 0.0
        %525 = vmatprep.subr.mxu0 0.0
        %526 = vmatpush1.msra.mxu0 0.0
        %527 = vmatprep.subr.mxu0 0.0
        %528 = vmatpush1.msra.mxu0 0.0
        %529 = vmatprep.subr.mxu0 0.0
        %530 = vmatpush1.msra.mxu0 0.0
        %531 = vmatprep.subr.mxu0 0.0
        %532 = vmatpush1.msra.mxu0 0.0
        %533 = vmatprep.subr.mxu0 0.0
        %534 = vmatpush1.msra.mxu0 0.0
        %535 = vmatprep.subr.mxu0 0.0
        %536 = vmatpush1.msra.mxu0 0.0
        %537 = vmatprep.subr.mxu0 0.0
        %538 = vmatpush1.msra.mxu0 0.0
        %539 = vmatprep.subr.mxu0 0.0
        %540 = vmatpush1.msra.mxu0 0.0
        %541 = vmatprep.subr.mxu0 0.0
        %542 = vmatpush1.msra.mxu0 0.0
        %543 = vmatprep.subr.mxu0 0.0
        %544 = vmatpush1.msra.mxu0 0.0
        %545 = vmatprep.subr.mxu0 0.0
        %546 = vmatpush1.msra.mxu0 0.0
        %547 = vmatprep.subr.mxu0 0.0
        %548 = vmatpush1.msra.mxu0 0.0
        %549 = vmatprep.subr.mxu0 0.0
        %550 = vmatpush1.msra.mxu0 0.0
        %551 = vmatprep.subr.mxu0 0.0
        %552 = vmatpush1.msra.mxu0 0.0
        %553 = vmatprep.mubr.f32.mxu0 0.0
        %554 = vmatmul.mubr.f32.gmra.mrb[0].mxu0 %v457
        %v555 = vpop.f32.mrb[0].mxu0
        %v556 = vadd.f32 0.0, %v555
        %v557 = vpop.f32.mrb[0].mxu0
        %558 = vmatprep.mubr.f32.mxu0 0.0
        %559 = vmatmul.mubr.f32.gmra.mrb[0].mxu0 %v458
        %v560 = vpop.f32.mrb[0].mxu0
        %v561 = vadd.f32 0.0, %v560
        %v562 = vpop.f32.mrb[0].mxu0
        %563 = vmatprep.mubr.f32.mxu0 0.0
        %564 = vmatmul.mubr.f32.gmra.mrb[0].mxu0 %v459
        %v565 = vpop.f32.mrb[0].mxu0
        %v566 = vadd.f32 0.0, %v565
        %v567 = vpop.f32.mrb[0].mxu0
        %568 = vmatprep.mubr.f32.mxu0 0.0
        %569 = vmatmul.mubr.f32.gmra.mrb[0].mxu0 %v460
        %v570 = vpop.f32.mrb[0].mxu0
        %v571 = vadd.f32 0.0, %v570
        %v572 = vpop.f32.mrb[0].mxu0
        %573 = vmatprep.mubr.f32.mxu0 0.0
        %574 = vmatmul.mubr.f32.gmra.mrb[0].mxu0 %v461
        %v575 = vpop.f32.mrb[0].mxu0
        %v576 = vadd.f32 0.0, %v575
        %v577 = vpop.f32.mrb[0].mxu0
        %578 = vmatprep.mubr.f32.mxu0 0.0
        %579 = vmatmul.mubr.f32.gmra.mrb[0].mxu0 %v462
        %v580 = vpop.f32.mrb[0].mxu0
        %v581 = vadd.f32 0.0, %v580
        %v582 = vpop.f32.mrb[0].mxu0
        %583 = vmatprep.mubr.f32.mxu0 0.0
        %584 = vmatmul.mubr.f32.gmra.mrb[0].mxu0 %v463
        %v585 = vpop.f32.mrb[0].mxu0
        %v586 = vadd.f32 0.0, %v585
        %v587 = vpop.f32.mrb[0].mxu0
        %588 = vmatprep.mubr.f32.mxu0 0.0
        %589 = vmatmul.mubr.f32.gmra.mrb[0].mxu0 %v464
        %v590 = vpop.f32.mrb[0].mxu0
        %v591 = vadd.f32 0.0, %v590
        %v592 = vpop.f32.mrb[0].mxu0
        %593 = vmatprep.mubr.f32.mxu0 0.0
        %594 = vmatmul.mubr.f32.gmra.mrb[0].mxu0 %v465
        %v595 = vpop.f32.mrb[0].mxu0
        %v596 = vadd.f32 0.0, %v595
        %v597 = vpop.f32.mrb[0].mxu0
        %598 = vmatprep.mubr.f32.mxu0 0.0
        %599 = vmatmul.mubr.f32.gmra.mrb[0].mxu0 %v466
        %v600 = vpop.f32.mrb[0].mxu0
        %v601 = vadd.f32 0.0, %v600
        %v602 = vpop.f32.mrb[0].mxu0
        %603 = vmatprep.mubr.f32.mxu0 0.0
        %604 = vmatmul.mubr.f32.gmra.mrb[0].mxu0 %v467
        %v605 = vpop.f32.mrb[0].mxu0
        %v606 = vadd.f32 0.0, %v605
        %v607 = vpop.f32.mrb[0].mxu0
        %608 = vmatprep.mubr.f32.mxu0 0.0
        %609 = vmatmul.mubr.f32.gmra.mrb[0].mxu0 %v468
        %v610 = vpop.f32.mrb[0].mxu0
        %v611 = vadd.f32 0.0, %v610
        %v612 = vpop.f32.mrb[0].mxu0
        %613 = vmatprep.mubr.f32.mxu0 0.0
        %614 = vmatmul.mubr.f32.gmra.mrb[0].mxu0 %v469
        %v615 = vpop.f32.mrb[0].mxu0
        %v616 = vadd.f32 0.0, %v615
        %v617 = vpop.f32.mrb[0].mxu0
        %618 = vmatprep.mubr.f32.mxu0 0.0
        %619 = vmatmul.mubr.f32.gmra.mrb[0].mxu0 %v470
        %v620 = vpop.f32.mrb[0].mxu0
        %v621 = vadd.f32 0.0, %v620
        %v622 = vpop.f32.mrb[0].mxu0
        %623 = vmatprep.mubr.f32.mxu0 0.0
        %624 = vmatmul.mubr.f32.gmra.mrb[0].mxu0 %v471
        %v625 = vpop.f32.mrb[0].mxu0
        %v626 = vadd.f32 0.0, %v625
        %v627 = vpop.f32.mrb[0].mxu0
        %628 = vmatprep.mubr.f32.mxu0 0.0
        %629 = vmatmul.mubr.f32.gmra.mrb[0].mxu0 %v472
        %v630 = vpop.f32.mrb[0].mxu0
        %v631 = vadd.f32 0.0, %v630
        %v632 = vpop.f32.mrb[0].mxu0
        %633 = vdwg.mxu0
        %v634 = vadd.f32 %v441, %v556
        %v635 = vadd.f32 %v442, %v561
        %v636 = vadd.f32 %v443, %v566
        %v637 = vadd.f32 %v444, %v571
        %v638 = vadd.f32 %v445, %v576
        %v639 = vadd.f32 %v446, %v581
        %v640 = vadd.f32 %v447, %v586
        %v641 = vadd.f32 %v448, %v591
        %v642 = vadd.f32 %v449, %v596
        %v643 = vadd.f32 %v450, %v601
        %v644 = vadd.f32 %v451, %v606
        %v645 = vadd.f32 %v452, %v611
        %v646 = vadd.f32 %v453, %v616
        %v647 = vadd.f32 %v454, %v621
        %v648 = vadd.f32 %v455, %v626
        %v649 = vadd.f32 %v456, %v631
        %650 = vst [vmem:[#allocation2] sm:$0xff] %v634
        %651 = vst [vmem:[#allocation2 + $0x8] sm:$0xff] %v635
        %652 = vst [vmem:[#allocation2 + $0x10] sm:$0xff] %v636
        %653 = vst [vmem:[#allocation2 + $0x18] sm:$0xff] %v637
        %654 = vst [vmem:[#allocation2 + $0x20] sm:$0xff] %v638
        %655 = vst [vmem:[#allocation2 + $0x28] sm:$0xff] %v639
        %656 = vst [vmem:[#allocation2 + $0x30] sm:$0xff] %v640
        %657 = vst [vmem:[#allocation2 + $0x38] sm:$0xff] %v641
        %658 = vst [vmem:[#allocation2 + $0x40] sm:$0xff] %v642
        %659 = vst [vmem:[#allocation2 + $0x48] sm:$0xff] %v643
        %660 = vst [vmem:[#allocation2 + $0x50] sm:$0xff] %v644
        %661 = vst [vmem:[#allocation2 + $0x58] sm:$0xff] %v645
        %662 = vst [vmem:[#allocation2 + $0x60] sm:$0xff] %v646
        %663 = vst [vmem:[#allocation2 + $0x68] sm:$0xff] %v647
        %664 = vst [vmem:[#allocation2 + $0x70] sm:$0xff] %v648
        %665 = vst [vmem:[#allocation2 + $0x78] sm:$0xff] %v649
        %p666 = scmp.eq.s32.totalorder %s26, 2
        // Predicated region
        $region83: #{ngcf_forward.3} parent=73 // pred_check
          %p667 = pneg %p666
        $region84: #{ngcf_forward.3} parent=73 // pred_check_branch
          %669 = sbr.rel (%p667) target = $region86
        $region85: #{ngcf_forward.3} parent=73 // pred_region
          %v670 = vld [vmem:[#allocation2] sm:$0xff]
          %v671 = vld [vmem:[#allocation2 + $0x8] sm:$0xff]
          %v672 = vld [vmem:[#allocation2 + $0x10] sm:$0xff]
          %v673 = vld [vmem:[#allocation2 + $0x18] sm:$0xff]
          %v674 = vld [vmem:[#allocation2 + $0x20] sm:$0xff]
          %v675 = vld [vmem:[#allocation2 + $0x28] sm:$0xff]
          %v676 = vld [vmem:[#allocation2 + $0x30] sm:$0xff]
          %v677 = vld [vmem:[#allocation2 + $0x38] sm:$0xff]
          %v678 = vld [vmem:[#allocation2 + $0x40] sm:$0xff]
          %v679 = vld [vmem:[#allocation2 + $0x48] sm:$0xff]
          %v680 = vld [vmem:[#allocation2 + $0x50] sm:$0xff]
          %v681 = vld [vmem:[#allocation2 + $0x58] sm:$0xff]
          %v682 = vld [vmem:[#allocation2 + $0x60] sm:$0xff]
          %v683 = vld [vmem:[#allocation2 + $0x68] sm:$0xff]
          %v684 = vld [vmem:[#allocation2 + $0x70] sm:$0xff]
          %v685 = vld [vmem:[#allocation2 + $0x78] sm:$0xff]
          %v686 = vld [vmem:[%s412] sm:$0xff]
          %v687 = vld [vmem:[%s412 + $0x8] sm:$0xff]
          %v688 = vld [vmem:[%s412 + $0x10] sm:$0xff]
          %v689 = vld [vmem:[%s412 + $0x18] sm:$0xff]
          %v690 = vld [vmem:[%s412 + $0x20] sm:$0xff]
          %v691 = vld [vmem:[%s412 + $0x28] sm:$0xff]
          %v692 = vld [vmem:[%s412 + $0x30] sm:$0xff]
          %v693 = vld [vmem:[%s412 + $0x38] sm:$0xff]
          %v694 = vld [vmem:[%s412 + $0x40] sm:$0xff]
          %v695 = vld [vmem:[%s412 + $0x48] sm:$0xff]
          %v696 = vld [vmem:[%s412 + $0x50] sm:$0xff]
          %v697 = vld [vmem:[%s412 + $0x58] sm:$0xff]
          %v698 = vld [vmem:[%s412 + $0x60] sm:$0xff]
          %v699 = vld [vmem:[%s412 + $0x68] sm:$0xff]
          %v700 = vld [vmem:[%s412 + $0x70] sm:$0xff]
          %v701 = vld [vmem:[%s412 + $0x78] sm:$0xff]
          %v702 = vmul.f32 %v686, %v670
          %v703 = vmul.f32 %v687, %v671
          %v704 = vmul.f32 %v688, %v672
          %v705 = vmul.f32 %v689, %v673
          %v706 = vmul.f32 %v690, %v674
          %v707 = vmul.f32 %v691, %v675
          %v708 = vmul.f32 %v692, %v676
          %v709 = vmul.f32 %v693, %v677
          %v710 = vmul.f32 %v694, %v678
          %v711 = vmul.f32 %v695, %v679
          %v712 = vmul.f32 %v696, %v680
          %v713 = vmul.f32 %v697, %v681
          %v714 = vmul.f32 %v698, %v682
          %v715 = vmul.f32 %v699, %v683
          %v716 = vmul.f32 %v700, %v684
          %v717 = vmul.f32 %v701, %v685
          %v718 = vld [vmem:[%s3] sm:$0xff]
          %v719 = vld [vmem:[%s3 + $0x8] sm:$0xff]
          %v720 = vld [vmem:[%s3 + $0x10] sm:$0xff]
          %v721 = vld [vmem:[%s3 + $0x18] sm:$0xff]
          %v722 = vld [vmem:[%s3 + $0x20] sm:$0xff]
          %v723 = vld [vmem:[%s3 + $0x28] sm:$0xff]
          %v724 = vld [vmem:[%s3 + $0x30] sm:$0xff]
          %v725 = vld [vmem:[%s3 + $0x38] sm:$0xff]
          %v726 = vld [vmem:[%s3 + $0x40] sm:$0xff]
          %v727 = vld [vmem:[%s3 + $0x48] sm:$0xff]
          %v728 = vld [vmem:[%s3 + $0x50] sm:$0xff]
          %v729 = vld [vmem:[%s3 + $0x58] sm:$0xff]
          %v730 = vld [vmem:[%s3 + $0x60] sm:$0xff]
          %v731 = vld [vmem:[%s3 + $0x68] sm:$0xff]
          %v732 = vld [vmem:[%s3 + $0x70] sm:$0xff]
          %v733 = vld [vmem:[%s3 + $0x78] sm:$0xff]
          %v734 = vld [vmem:[%s3 + $0x80] sm:$0xff]
          %v735 = vld [vmem:[%s3 + $0x88] sm:$0xff]
          %v736 = vld [vmem:[%s3 + $0x90] sm:$0xff]
          %v737 = vld [vmem:[%s3 + $0x98] sm:$0xff]
          %v738 = vld [vmem:[%s3 + $0xa0] sm:$0xff]
          %v739 = vld [vmem:[%s3 + $0xa8] sm:$0xff]
          %v740 = vld [vmem:[%s3 + $0xb0] sm:$0xff]
          %v741 = vld [vmem:[%s3 + $0xb8] sm:$0xff]
          %v742 = vld [vmem:[%s3 + $0xc0] sm:$0xff]
          %v743 = vld [vmem:[%s3 + $0xc8] sm:$0xff]
          %v744 = vld [vmem:[%s3 + $0xd0] sm:$0xff]
          %v745 = vld [vmem:[%s3 + $0xd8] sm:$0xff]
          %v746 = vld [vmem:[%s3 + $0xe0] sm:$0xff]
          %v747 = vld [vmem:[%s3 + $0xe8] sm:$0xff]
          %v748 = vld [vmem:[%s3 + $0xf0] sm:$0xff]
          %v749 = vld [vmem:[%s3 + $0xf8] sm:$0xff]
          %v750 = vld [vmem:[%s4] sm:$0x1]
          %v752 = vlaneseq
          %v753 = vshrl.u32 %v752, 7
          %v754 = vsub.s32 0, %v753
          %v755 = vrot.slane %v750, %v754
          %757 = vmatprep.subr.mxu0 0.0
          %758 = vmatpush1.msra.mxu0 %v718
          %759 = vmatprep.subr.mxu0 0.0
          %760 = vmatpush1.msra.mxu0 %v719
          %761 = vmatprep.subr.mxu0 0.0
          %762 = vmatpush1.msra.mxu0 %v720
          %763 = vmatprep.subr.mxu0 0.0
          %764 = vmatpush1.msra.mxu0 %v721
          %765 = vmatprep.subr.mxu0 0.0
          %766 = vmatpush1.msra.mxu0 %v722
          %767 = vmatprep.subr.mxu0 0.0
          %768 = vmatpush1.msra.mxu0 %v723
          %769 = vmatprep.subr.mxu0 0.0
          %770 = vmatpush1.msra.mxu0 %v724
          %771 = vmatprep.subr.mxu0 0.0
          %772 = vmatpush1.msra.mxu0 %v725
          %773 = vmatprep.subr.mxu0 0.0
          %774 = vmatpush1.msra.mxu0 %v726
          %775 = vmatprep.subr.mxu0 0.0
          %776 = vmatpush1.msra.mxu0 %v727
          %777 = vmatprep.subr.mxu0 0.0
          %778 = vmatpush1.msra.mxu0 %v728
          %779 = vmatprep.subr.mxu0 0.0
          %780 = vmatpush1.msra.mxu0 %v729
          %781 = vmatprep.subr.mxu0 0.0
          %782 = vmatpush1.msra.mxu0 %v730
          %783 = vmatprep.subr.mxu0 0.0
          %784 = vmatpush1.msra.mxu0 %v731
          %785 = vmatprep.subr.mxu0 0.0
          %786 = vmatpush1.msra.mxu0 %v732
          %787 = vmatprep.subr.mxu0 0.0
          %788 = vmatpush1.msra.mxu0 %v733
          %789 = vmatprep.subr.mxu0 0.0
          %790 = vmatpush1.msra.mxu0 %v734
          %791 = vmatprep.subr.mxu0 0.0
          %792 = vmatpush1.msra.mxu0 %v735
          %793 = vmatprep.subr.mxu0 0.0
          %794 = vmatpush1.msra.mxu0 %v736
          %795 = vmatprep.subr.mxu0 0.0
          %796 = vmatpush1.msra.mxu0 %v737
          %797 = vmatprep.subr.mxu0 0.0
          %798 = vmatpush1.msra.mxu0 %v738
          %799 = vmatprep.subr.mxu0 0.0
          %800 = vmatpush1.msra.mxu0 %v739
          %801 = vmatprep.subr.mxu0 0.0
          %802 = vmatpush1.msra.mxu0 %v740
          %803 = vmatprep.subr.mxu0 0.0
          %804 = vmatpush1.msra.mxu0 %v741
          %805 = vmatprep.subr.mxu0 0.0
          %806 = vmatpush1.msra.mxu0 %v742
          %807 = vmatprep.subr.mxu0 0.0
          %808 = vmatpush1.msra.mxu0 %v743
          %809 = vmatprep.subr.mxu0 0.0
          %810 = vmatpush1.msra.mxu0 %v744
          %811 = vmatprep.subr.mxu0 0.0
          %812 = vmatpush1.msra.mxu0 %v745
          %813 = vmatprep.subr.mxu0 0.0
          %814 = vmatpush1.msra.mxu0 %v746
          %815 = vmatprep.subr.mxu0 0.0
          %816 = vmatpush1.msra.mxu0 %v747
          %817 = vmatprep.subr.mxu0 0.0
          %818 = vmatpush1.msra.mxu0 %v748
          %819 = vmatprep.subr.mxu0 0.0
          %820 = vmatpush1.msra.mxu0 %v749
          %821 = vmatprep.mubr.f32.mxu0 %v702
          %822 = vmatmul.mubr.f32.gmra.mrb[0].mxu0 %v670
          %v823 = vpop.f32.mrb[0].mxu0
          %v824 = vadd.f32 %v755, %v823
          %v825 = vpop.f32.mrb[0].mxu0
          %826 = vmatprep.mubr.f32.mxu0 %v703
          %827 = vmatmul.mubr.f32.gmra.mrb[0].mxu0 %v671
          %v828 = vpop.f32.mrb[0].mxu0
          %v829 = vadd.f32 %v755, %v828
          %v830 = vpop.f32.mrb[0].mxu0
          %831 = vmatprep.mubr.f32.mxu0 %v704
          %832 = vmatmul.mubr.f32.gmra.mrb[0].mxu0 %v672
          %v833 = vpop.f32.mrb[0].mxu0
          %v834 = vadd.f32 %v755, %v833
          %v835 = vpop.f32.mrb[0].mxu0
          %836 = vmatprep.mubr.f32.mxu0 %v705
          %837 = vmatmul.mubr.f32.gmra.mrb[0].mxu0 %v673
          %v838 = vpop.f32.mrb[0].mxu0
          %v839 = vadd.f32 %v755, %v838
          %v840 = vpop.f32.mrb[0].mxu0
          %841 = vmatprep.mubr.f32.mxu0 %v706
          %842 = vmatmul.mubr.f32.gmra.mrb[0].mxu0 %v674
          %v843 = vpop.f32.mrb[0].mxu0
          %v844 = vadd.f32 %v755, %v843
          %v845 = vpop.f32.mrb[0].mxu0
          %846 = vmatprep.mubr.f32.mxu0 %v707
          %847 = vmatmul.mubr.f32.gmra.mrb[0].mxu0 %v675
          %v848 = vpop.f32.mrb[0].mxu0
          %v849 = vadd.f32 %v755, %v848
          %v850 = vpop.f32.mrb[0].mxu0
          %851 = vmatprep.mubr.f32.mxu0 %v708
          %852 = vmatmul.mubr.f32.gmra.mrb[0].mxu0 %v676
          %v853 = vpop.f32.mrb[0].mxu0
          %v854 = vadd.f32 %v755, %v853
          %v855 = vpop.f32.mrb[0].mxu0
          %856 = vmatprep.mubr.f32.mxu0 %v709
          %857 = vmatmul.mubr.f32.gmra.mrb[0].mxu0 %v677
          %v858 = vpop.f32.mrb[0].mxu0
          %v859 = vadd.f32 %v755, %v858
          %v860 = vpop.f32.mrb[0].mxu0
          %861 = vmatprep.mubr.f32.mxu0 %v710
          %862 = vmatmul.mubr.f32.gmra.mrb[0].mxu0 %v678
          %v863 = vpop.f32.mrb[0].mxu0
          %v864 = vadd.f32 %v755, %v863
          %v865 = vpop.f32.mrb[0].mxu0
          %866 = vmatprep.mubr.f32.mxu0 %v711
          %867 = vmatmul.mubr.f32.gmra.mrb[0].mxu0 %v679
          %v868 = vpop.f32.mrb[0].mxu0
          %v869 = vadd.f32 %v755, %v868
          %v870 = vpop.f32.mrb[0].mxu0
          %871 = vmatprep.mubr.f32.mxu0 %v712
          %872 = vmatmul.mubr.f32.gmra.mrb[0].mxu0 %v680
          %v873 = vpop.f32.mrb[0].mxu0
          %v874 = vadd.f32 %v755, %v873
          %v875 = vpop.f32.mrb[0].mxu0
          %876 = vmatprep.mubr.f32.mxu0 %v713
          %877 = vmatmul.mubr.f32.gmra.mrb[0].mxu0 %v681
          %v878 = vpop.f32.mrb[0].mxu0
          %v879 = vadd.f32 %v755, %v878
          %v880 = vpop.f32.mrb[0].mxu0
          %881 = vmatprep.mubr.f32.mxu0 %v714
          %882 = vmatmul.mubr.f32.gmra.mrb[0].mxu0 %v682
          %v883 = vpop.f32.mrb[0].mxu0
          %v884 = vadd.f32 %v755, %v883
          %v885 = vpop.f32.mrb[0].mxu0
          %886 = vmatprep.mubr.f32.mxu0 %v715
          %887 = vmatmul.mubr.f32.gmra.mrb[0].mxu0 %v683
          %v888 = vpop.f32.mrb[0].mxu0
          %v889 = vadd.f32 %v755, %v888
          %v890 = vpop.f32.mrb[0].mxu0
          %891 = vmatprep.mubr.f32.mxu0 %v716
          %892 = vmatmul.mubr.f32.gmra.mrb[0].mxu0 %v684
          %v893 = vpop.f32.mrb[0].mxu0
          %v894 = vadd.f32 %v755, %v893
          %v895 = vpop.f32.mrb[0].mxu0
          %896 = vmatprep.mubr.f32.mxu0 %v717
          %897 = vmatmul.mubr.f32.gmra.mrb[0].mxu0 %v685
          %v898 = vpop.f32.mrb[0].mxu0
          %v899 = vadd.f32 %v755, %v898
          %v900 = vpop.f32.mrb[0].mxu0
          %901 = vdwg.mxu0
          %vm902 = vcmp.ge.f32.partialorder %v824, 0.0
          %vm903 = vcmp.ge.f32.partialorder %v829, 0.0
          %vm904 = vcmp.ge.f32.partialorder %v834, 0.0
          %vm905 = vcmp.ge.f32.partialorder %v839, 0.0
          %vm906 = vcmp.ge.f32.partialorder %v844, 0.0
          %vm907 = vcmp.ge.f32.partialorder %v849, 0.0
          %vm908 = vcmp.ge.f32.partialorder %v854, 0.0
          %vm909 = vcmp.ge.f32.partialorder %v859, 0.0
          %vm910 = vcmp.ge.f32.partialorder %v864, 0.0
          %vm911 = vcmp.ge.f32.partialorder %v869, 0.0
          %vm912 = vcmp.ge.f32.partialorder %v874, 0.0
          %vm913 = vcmp.ge.f32.partialorder %v879, 0.0
          %vm914 = vcmp.ge.f32.partialorder %v884, 0.0
          %vm915 = vcmp.ge.f32.partialorder %v889, 0.0
          %vm916 = vcmp.ge.f32.partialorder %v894, 0.0
          %vm917 = vcmp.ge.f32.partialorder %v899, 0.0
          %v918 = vmul.f32 %v824, 0.2
          %v919 = vmul.f32 %v829, 0.2
          %v920 = vmul.f32 %v834, 0.2
          %v921 = vmul.f32 %v839, 0.2
          %v922 = vmul.f32 %v844, 0.2
          %v923 = vmul.f32 %v849, 0.2
          %v924 = vmul.f32 %v854, 0.2
          %v925 = vmul.f32 %v859, 0.2
          %v926 = vmul.f32 %v864, 0.2
          %v927 = vmul.f32 %v869, 0.2
          %v928 = vmul.f32 %v874, 0.2
          %v929 = vmul.f32 %v879, 0.2
          %v930 = vmul.f32 %v884, 0.2
          %v931 = vmul.f32 %v889, 0.2
          %v932 = vmul.f32 %v894, 0.2
          %v933 = vmul.f32 %v899, 0.2
          %v934 = vsel %vm902, %v824, %v918
          %v935 = vsel %vm903, %v829, %v919
          %v936 = vsel %vm904, %v834, %v920
          %v937 = vsel %vm905, %v839, %v921
          %v938 = vsel %vm906, %v844, %v922
          %v939 = vsel %vm907, %v849, %v923
          %v940 = vsel %vm908, %v854, %v924
          %v941 = vsel %vm909, %v859, %v925
          %v942 = vsel %vm910, %v864, %v926
          %v943 = vsel %vm911, %v869, %v927
          %v944 = vsel %vm912, %v874, %v928
          %v945 = vsel %vm913, %v879, %v929
          %v946 = vsel %vm914, %v884, %v930
          %v947 = vsel %vm915, %v889, %v931
          %v948 = vsel %vm916, %v894, %v932
          %v949 = vsel %vm917, %v899, %v933
          %950 = vst [vmem:[%s393] sm:$0xff] %v934
          %951 = vst [vmem:[%s393 + $0x8] sm:$0xff] %v935
          %952 = vst [vmem:[%s393 + $0x10] sm:$0xff] %v936
          %953 = vst [vmem:[%s393 + $0x18] sm:$0xff] %v937
          %954 = vst [vmem:[%s393 + $0x20] sm:$0xff] %v938
          %955 = vst [vmem:[%s393 + $0x28] sm:$0xff] %v939
          %956 = vst [vmem:[%s393 + $0x30] sm:$0xff] %v940
          %957 = vst [vmem:[%s393 + $0x38] sm:$0xff] %v941
          %958 = vst [vmem:[%s393 + $0x40] sm:$0xff] %v942
          %959 = vst [vmem:[%s393 + $0x48] sm:$0xff] %v943
          %960 = vst [vmem:[%s393 + $0x50] sm:$0xff] %v944
          %961 = vst [vmem:[%s393 + $0x58] sm:$0xff] %v945
          %962 = vst [vmem:[%s393 + $0x60] sm:$0xff] %v946
          %963 = vst [vmem:[%s393 + $0x68] sm:$0xff] %v947
          %964 = vst [vmem:[%s393 + $0x70] sm:$0xff] %v948
          %965 = vst [vmem:[%s393 + $0x78] sm:$0xff] %v949
          %v966 = vmul.f32 %v934, %v934
          %v967 = vmul.f32 %v935, %v935
          %v968 = vmul.f32 %v936, %v936
          %v969 = vmul.f32 %v937, %v937
          %v970 = vmul.f32 %v938, %v938
          %v971 = vmul.f32 %v939, %v939
          %v972 = vmul.f32 %v940, %v940
          %v973 = vmul.f32 %v941, %v941
          %v974 = vmul.f32 %v942, %v942
          %v975 = vmul.f32 %v943, %v943
          %v976 = vmul.f32 %v944, %v944
          %v977 = vmul.f32 %v945, %v945
          %v978 = vmul.f32 %v946, %v946
          %v979 = vmul.f32 %v947, %v947
          %v980 = vmul.f32 %v948, %v948
          %v981 = vmul.f32 %v949, %v949
          %982 = vadd.xlane.f32.xlu0 %v966
          %v983 = vpop.xlane.xlu0 %982
          %984 = vadd.xlane.f32.xlu0 %v967
          %v985 = vpop.xlane.xlu0 %984
          %986 = vadd.xlane.f32.xlu0 %v968
          %v987 = vpop.xlane.xlu0 %986
          %988 = vadd.xlane.f32.xlu0 %v969
          %v989 = vpop.xlane.xlu0 %988
          %990 = vadd.xlane.f32.xlu0 %v970
          %v991 = vpop.xlane.xlu0 %990
          %992 = vadd.xlane.f32.xlu0 %v971
          %v993 = vpop.xlane.xlu0 %992
          %994 = vadd.xlane.f32.xlu0 %v972
          %v995 = vpop.xlane.xlu0 %994
          %996 = vadd.xlane.f32.xlu0 %v973
          %v997 = vpop.xlane.xlu0 %996
          %998 = vadd.xlane.f32.xlu0 %v974
          %v999 = vpop.xlane.xlu0 %998
          %1000 = vadd.xlane.f32.xlu0 %v975
          %v1001 = vpop.xlane.xlu0 %1000
          %1002 = vadd.xlane.f32.xlu0 %v976
          %v1003 = vpop.xlane.xlu0 %1002
          %1004 = vadd.xlane.f32.xlu0 %v977
          %v1005 = vpop.xlane.xlu0 %1004
          %1006 = vadd.xlane.f32.xlu0 %v978
          %v1007 = vpop.xlane.xlu0 %1006
          %1008 = vadd.xlane.f32.xlu0 %v979
          %v1009 = vpop.xlane.xlu0 %1008
          %1010 = vadd.xlane.f32.xlu0 %v980
          %v1011 = vpop.xlane.xlu0 %1010
          %1012 = vadd.xlane.f32.xlu0 %v981
          %v1013 = vpop.xlane.xlu0 %1012
          %v1014 = vmax.f32 %v983, 1e-24
          %v1015 = vmax.f32 %v985, 1e-24
          %v1016 = vmax.f32 %v987, 1e-24
          %v1017 = vmax.f32 %v989, 1e-24
          %v1018 = vmax.f32 %v991, 1e-24
          %v1019 = vmax.f32 %v993, 1e-24
          %v1020 = vmax.f32 %v995, 1e-24
          %v1021 = vmax.f32 %v997, 1e-24
          %v1022 = vmax.f32 %v999, 1e-24
          %v1023 = vmax.f32 %v1001, 1e-24
          %v1024 = vmax.f32 %v1003, 1e-24
          %v1025 = vmax.f32 %v1005, 1e-24
          %v1026 = vmax.f32 %v1007, 1e-24
          %v1027 = vmax.f32 %v1009, 1e-24
          %v1028 = vmax.f32 %v1011, 1e-24
          %v1029 = vmax.f32 %v1013, 1e-24
          %v1030 = vrsqrt.pop %v1014
          %v1031 = vrsqrt.pop %v1015
          %v1032 = vrsqrt.pop %v1016
          %v1033 = vrsqrt.pop %v1017
          %v1034 = vrsqrt.pop %v1018
          %v1035 = vrsqrt.pop %v1019
          %v1036 = vrsqrt.pop %v1020
          %v1037 = vrsqrt.pop %v1021
          %v1038 = vrsqrt.pop %v1022
          %v1039 = vrsqrt.pop %v1023
          %v1040 = vrsqrt.pop %v1024
          %v1041 = vrsqrt.pop %v1025
          %v1042 = vrsqrt.pop %v1026
          %v1043 = vrsqrt.pop %v1027
          %v1044 = vrsqrt.pop %v1028
          %v1045 = vrsqrt.pop %v1029
          %v1046 = vmul.f32 %v934, %v1030
          %v1047 = vmul.f32 %v935, %v1031
          %v1048 = vmul.f32 %v936, %v1032
          %v1049 = vmul.f32 %v937, %v1033
          %v1050 = vmul.f32 %v938, %v1034
          %v1051 = vmul.f32 %v939, %v1035
          %v1052 = vmul.f32 %v940, %v1036
          %v1053 = vmul.f32 %v941, %v1037
          %v1054 = vmul.f32 %v942, %v1038
          %v1055 = vmul.f32 %v943, %v1039
          %v1056 = vmul.f32 %v944, %v1040
          %v1057 = vmul.f32 %v945, %v1041
          %v1058 = vmul.f32 %v946, %v1042
          %v1059 = vmul.f32 %v947, %v1043
          %v1060 = vmul.f32 %v948, %v1044
          %v1061 = vmul.f32 %v949, %v1045
          %1062 = vst [vmem:[%s419] sm:$0xff] %v1046
          %1063 = vst [vmem:[%s419 + $0x8] sm:$0xff] %v1047
          %1064 = vst [vmem:[%s419 + $0x10] sm:$0xff] %v1048
          %1065 = vst [vmem:[%s419 + $0x18] sm:$0xff] %v1049
          %1066 = vst [vmem:[%s419 + $0x20] sm:$0xff] %v1050
          %1067 = vst [vmem:[%s419 + $0x28] sm:$0xff] %v1051
          %1068 = vst [vmem:[%s419 + $0x30] sm:$0xff] %v1052
          %1069 = vst [vmem:[%s419 + $0x38] sm:$0xff] %v1053
          %1070 = vst [vmem:[%s419 + $0x40] sm:$0xff] %v1054
          %1071 = vst [vmem:[%s419 + $0x48] sm:$0xff] %v1055
          %1072 = vst [vmem:[%s419 + $0x50] sm:$0xff] %v1056
          %1073 = vst [vmem:[%s419 + $0x58] sm:$0xff] %v1057
          %1074 = vst [vmem:[%s419 + $0x60] sm:$0xff] %v1058
          %1075 = vst [vmem:[%s419 + $0x68] sm:$0xff] %v1059
          %1076 = vst [vmem:[%s419 + $0x70] sm:$0xff] %v1060
          %1077 = vst [vmem:[%s419 + $0x78] sm:$0xff] %v1061
        $region86: #{ngcf_forward.3} parent=73 // pred_fallthru
          _
        %s1078 = sand.u32 %s163, 1
        %s1079 = scalar_lea.sflag [#allocation5], %s1078
        %s1080 = sand.u32 %s163, 1
        %s1081 = smul.addr %s1080, 128
        %s1082 = scalar_lea.vmem [#allocation4], %s1081
        %s1083 = smul.u32 16, %s25
        %p1084 = scmp.lt.s32.totalorder %s1083, 47
        %s1085 = scalar_select %p1084, %s1083, 47
        %s1086 = smul.addr %s1085, 8
        %s1087 = scalar_lea.vmem %s6, %s1086
        // Predicated region
        $region87: #{ngcf_forward.3} parent=73 // pred_check
          %p1088 = pneg %p173
        $region88: #{ngcf_forward.3} parent=73 // pred_check_branch
          %1090 = sbr.rel (%p1088) target = $region90
        $region89: #{ngcf_forward.3} parent=73 // pred_region
          %s1091 = smul.u32 16, %s25
          %s1093 = ssub.s32 2048, 2048
          %1094 = vsyncadd %s1079, %s1093
          %s1095 = smul.addr %s1091, 128
          %s1096 = scalar_lea.hbm %s5, %s1095
          %s1097 = sshll.u32 %s1082, 4
          %s1098 = int_to_ptr.vmem [resolvable:$true] %s1097
          %1103 = dma.vmem_to_hbm [thread:$0]  %s1098, 2048, %s1096, %s1079, 128, 128, 8
        $region90: #{ngcf_forward.3} parent=73 // pred_fallthru
          _
        // Predicated region
        $region91: #{ngcf_forward.3} parent=73 // pred_check
          %p1104 = pneg %p199
        $region92: #{ngcf_forward.3} parent=73 // pred_check_branch
          %1106 = sbr.rel (%p1104) target = $region94
        $region93: #{ngcf_forward.3} parent=73 // pred_region
          %s1107 = smul.u32 16, %s25
        $region94: #{ngcf_forward.3} parent=73 // pred_fallthru
          _
      $region74: #{ngcf_forward.3} parent=5 // pred_fallthru
        _
      %p1108 = scmp.le.s32.totalorder 2, %s16
      // Predicated region
      $region95: #{ngcf_forward.3} parent=5 // pred_check
        %p1109 = pneg %p1108
      $region96: #{ngcf_forward.3} parent=5 // pred_check_branch
        %1111 = sbr.rel (%p1109) target = $region98
      $region97: #{ngcf_forward.3} parent=5 // pred_region
        %s1112 = ssub.s32 %s16, 2
        // Predicated region
        $region99: #{ngcf_forward.3} parent=97 // pred_check
          %p1113 = pneg %p179
        $region100: #{ngcf_forward.3} parent=97 // pred_check_branch
          %1115 = sbr.rel (%p1113) target = $region102
        $region101: #{ngcf_forward.3} parent=97 // pred_region
          %s1116 = sand.u32 %s164, 1
          %s1117 = scalar_lea.sflag [#allocation5], %s1116
          %s1118 = sand.u32 %s164, 1
          %s1119 = smul.addr %s1118, 128
          %s1120 = scalar_lea.vmem [#allocation4], %s1119
          %1121 = dma.done %s1117, 2048
        $region102: #{ngcf_forward.3} parent=97 // pred_fallthru
          _
        // Predicated region
        $region103: #{ngcf_forward.3} parent=97 // pred_check
          %p1122 = pneg %p205
        $region104: #{ngcf_forward.3} parent=97 // pred_check_branch
          %1124 = sbr.rel (%p1122) target = $region106
        $region105: #{ngcf_forward.3} parent=97 // pred_region
          %s1125 = smul.u32 16, %s27
          %p1126 = scmp.lt.s32.totalorder %s1125, 47
          %s1127 = scalar_select %p1126, %s1125, 47
          %s1128 = smul.addr %s1127, 8
          %s1129 = scalar_lea.vmem %s6, %s1128
        $region106: #{ngcf_forward.3} parent=97 // pred_fallthru
          _
      $region98: #{ngcf_forward.3} parent=5 // pred_fallthru
        _
    $region6: #{ngcf_forward.3} parent=1 // loop_footer
      %s20 = sadd.s32 1, %s16
    $region7: #{ngcf_forward.3} parent=1 // loop_footer_branch
      %15 = sbr.rel target = $region3
    $region8: #{ngcf_forward.3} parent=1 // loop_exit
      _
    %1130 = vsyncpa [#allocation5], 1
    %s1131 = scalar_lea.sflag [#allocation5], 1
    %1132 = vsyncpa %s1131, 1

</llo_original>
